<compile_context>
chip_gen: v5e
topology: v5e:2x2
jax: 0.10.0
libtpu: 0.0.40
codegen_flags: <defaults>
</compile_context>

<pallas_src>
import jax
import jax.numpy as jnp
from jax.experimental import pallas as pl
from jax.experimental.pallas import tpu as pltpu

# ------------------------------------------------------------------ config ---
HIDDEN = 32
NUM_HEADS = 2
HEAD_DIM = HIDDEN // NUM_HEADS
NUM_LAYERS = 2
INTERMEDIATE = 64
VOCAB = 50
MAX_POS = 16
TYPE_VOCAB = 2
NUM_DEPARTMENTS = 4
NUM_SKILLS = 6
LN_EPS = 1e-12
HEAD_PAD = 128  # lane-dense padded width of the fused classification heads

_VMEM_SPEC = pl.BlockSpec(memory_space=pltpu.MemorySpace.VMEM)


# ------------------------------------------------------------ kernel helpers ---
def _gelu(x):
    # TODO(synk): HF BERT uses the erf-based GELU; tanh approximation used here.
    return 0.5 * x * (1.0 + jnp.tanh(0.7978845608028654 * (x + 0.044715 * x * x * x)))


def _layernorm(x, g, b):
    mu = jnp.mean(x, axis=-1, keepdims=True)
    d = x - mu
    var = jnp.mean(d * d, axis=-1, keepdims=True)
    return d * jax.lax.rsqrt(var + LN_EPS) * g + b


# --------------------------------------------------------------- fused kernel ---
def _fused_bert_kernel(
    emb_ref,        # [B*S, H]   pre-LayerNorm embeddings
    mask_ref,       # [B*S, B*S] additive mask (block-diag batches + key padding)
    cls_sel_ref,    # [B, B*S]   one-hot [CLS]-row selection matrix
    eln_g_ref, eln_b_ref,                    # [1, H]
    wqkv_ref, bqkv_ref,                      # [L, H, 3H], [L, 1, 3H] (Q pre-scaled)
    wo_ref, bo_ref,                          # [L, H, H],  [L, 1, H]
    ln1_g_ref, ln1_b_ref,                    # [L, 1, H]
    w1_ref, b1_ref,                          # [L, H, I],  [L, 1, I]
    w2_ref, b2_ref,                          # [L, I, H],  [L, 1, H]
    ln2_g_ref, ln2_b_ref,                    # [L, 1, H]
    pool_w_ref, pool_b_ref,                  # [H, H], [1, H]
    head_w_ref, head_b_ref,                  # [H, 128], [1, 128] (zero padded)
    out_ref,                                 # [B, 128]
):
    x = _layernorm(emb_ref[...], eln_g_ref[...], eln_b_ref[...])
    mask = mask_ref[...]

    for l in range(NUM_LAYERS):  # static unroll (NUM_LAYERS = 2)
        # ---- self attention (fused QKV projection; scale folded into W_Q) ----
        qkv = jnp.dot(x, wqkv_ref[l], preferred_element_type=jnp.float32) + bqkv_ref[l]
        wo = wo_ref[l]

        attn_out = None
        for h in range(NUM_HEADS):  # static unroll (NUM_HEADS = 2)
            qh = qkv[:, h * HEAD_DIM:(h + 1) * HEAD_DIM]
            kh = qkv[:, HIDDEN + h * HEAD_DIM:HIDDEN + (h + 1) * HEAD_DIM]
            vh = qkv[:, 2 * HIDDEN + h * HEAD_DIM:2 * HIDDEN + (h + 1) * HEAD_DIM]

            # scores over all B*S keys; block-diagonal mask keeps batches separate
            s = jax.lax.dot_general(
                qh, kh, (((1,), (1,)), ((), ())),
                preferred_element_type=jnp.float32) + mask
            s = s - jnp.max(s, axis=-1, keepdims=True)
            p = jnp.exp(s)
            p = p * pl.reciprocal(jnp.sum(p, axis=-1, keepdims=True), approx=True)

            ctx_h = jnp.dot(p, vh, preferred_element_type=jnp.float32)       # [B*S, Dh]
            # fold the output projection per head:  ctx @ Wo == sum_h ctx_h @ Wo[h]
            part = jnp.dot(ctx_h, wo[h * HEAD_DIM:(h + 1) * HEAD_DIM, :],
                           preferred_element_type=jnp.float32)
            attn_out = part if attn_out is None else attn_out + part
        attn_out = attn_out + bo_ref[l]

        x = _layernorm(x + attn_out, ln1_g_ref[l], ln1_b_ref[l])

        # ---- feed forward ----
        hmid = jnp.dot(x, w1_ref[l], preferred_element_type=jnp.float32) + b1_ref[l]
        hmid = _gelu(hmid)
        ff = jnp.dot(hmid, w2_ref[l], preferred_element_type=jnp.float32) + b2_ref[l]
        x = _layernorm(x + ff, ln2_g_ref[l], ln2_b_ref[l])

    # ---- pooler on [CLS] tokens (row selection via one-hot matmul -> MXU) ----
    cls = jnp.dot(cls_sel_ref[...], x, preferred_element_type=jnp.float32)   # [B, H]
    pooled = jnp.tanh(
        jnp.dot(cls, pool_w_ref[...], preferred_element_type=jnp.float32) + pool_b_ref[...]
    )
    # dropout(p=0.1) == identity at inference
    out_ref[...] = (
        jnp.dot(pooled, head_w_ref[...], preferred_element_type=jnp.float32)
        + head_b_ref[...]
    )


# ------------------------------------------------------------------ params ---
def _dense(key, fan_in, fan_out):
    return (0.02 * jax.random.normal(key, (fan_in, fan_out), jnp.float32),
            jnp.zeros((fan_out,), jnp.float32))


def init_params(key):
    keys = jax.random.split(key, 8 + NUM_LAYERS)
    params = {
        "word_emb": 0.02 * jax.random.normal(keys[0], (VOCAB, HIDDEN), jnp.float32),
        "pos_emb": 0.02 * jax.random.normal(keys[1], (MAX_POS, HIDDEN), jnp.float32),
        "type_emb": 0.02 * jax.random.normal(keys[2], (TYPE_VOCAB, HIDDEN), jnp.float32),
        "emb_ln_g": jnp.ones((HIDDEN,), jnp.float32),
        "emb_ln_b": jnp.zeros((HIDDEN,), jnp.float32),
    }
    layers = []
    for li in range(NUM_LAYERS):
        lk = jax.random.split(keys[3 + li], 6)
        wq, bq = _dense(lk[0], HIDDEN, HIDDEN)
        wk, bk = _dense(lk[1], HIDDEN, HIDDEN)
        wv, bv = _dense(lk[2], HIDDEN, HIDDEN)
        wo, bo = _dense(lk[3], HIDDEN, HIDDEN)
        w1, b1 = _dense(lk[4], HIDDEN, INTERMEDIATE)
        w2, b2 = _dense(lk[5], INTERMEDIATE, HIDDEN)
        layers.append(dict(
            wq=wq, bq=bq, wk=wk, bk=bk, wv=wv, bv=bv, wo=wo, bo=bo,
            ln1_g=jnp.ones((HIDDEN,), jnp.float32),
            ln1_b=jnp.zeros((HIDDEN,), jnp.float32),
            w1=w1, b1=b1, w2=w2, b2=b2,
            ln2_g=jnp.ones((HIDDEN,), jnp.float32),
            ln2_b=jnp.zeros((HIDDEN,), jnp.float32),
        ))
    params["layers"] = layers
    hk = jax.random.split(keys[3 + NUM_LAYERS], 5)
    params["pool_w"], params["pool_b"] = _dense(hk[0], HIDDEN, HIDDEN)
    params["cls_w"], params["cls_b"] = _dense(hk[1], HIDDEN, 2)
    params["src_w"], params["src_b"] = _dense(hk[2], HIDDEN, 2)
    params["dep_w"], params["dep_b"] = _dense(hk[3], HIDDEN, NUM_DEPARTMENTS)
    params["skl_w"], params["skl_b"] = _dense(hk[4], HIDDEN, NUM_SKILLS)
    return params


def _pack_params(p):
    """Stack per-layer weights on a leading axis, fuse QKV / head weights and
    fold the attention scale 1/sqrt(head_dim) into the Q projection."""
    layers = p["layers"]
    H = HIDDEN
    scale = 1.0 / (HEAD_DIM ** 0.5)

    def stk(fn):
        return jnp.stack([fn(l) for l in layers])

    packed = {
        "eln_g": p["emb_ln_g"].reshape(1, H),
        "eln_b": p["emb_ln_b"].reshape(1, H),
        "wqkv": stk(lambda l: jnp.concatenate(
            [l["wq"] * scale, l["wk"], l["wv"]], axis=1)),
        "bqkv": stk(lambda l: jnp.concatenate(
            [l["bq"] * scale, l["bk"], l["bv"]]).reshape(1, 3 * H)),
        "wo": stk(lambda l: l["wo"]),
        "bo": stk(lambda l: l["bo"].reshape(1, H)),
        "ln1_g": stk(lambda l: l["ln1_g"].reshape(1, H)),
        "ln1_b": stk(lambda l: l["ln1_b"].reshape(1, H)),
        "w1": stk(lambda l: l["w1"]),
        "b1": stk(lambda l: l["b1"].reshape(1, INTERMEDIATE)),
        "w2": stk(lambda l: l["w2"]),
        "b2": stk(lambda l: l["b2"].reshape(1, H)),
        "ln2_g": stk(lambda l: l["ln2_g"].reshape(1, H)),
        "ln2_b": stk(lambda l: l["ln2_b"].reshape(1, H)),
        "pool_w": p["pool_w"],
        "pool_b": p["pool_b"].reshape(1, H),
    }
    head_w = jnp.concatenate([p["cls_w"], p["src_w"], p["dep_w"], p["skl_w"]], axis=1)  # [H,14]
    head_b = jnp.concatenate([p["cls_b"], p["src_b"], p["dep_b"], p["skl_b"]])          # [14]
    n = head_w.shape[1]
    packed["head_w"] = jnp.pad(head_w, ((0, 0), (0, HEAD_PAD - n)))
    packed["head_b"] = jnp.pad(head_b, (0, HEAD_PAD - n)).reshape(1, HEAD_PAD)
    return packed


# ----------------------------------------------------------------- forward ---
def multitask_bert_forward(params, input_ids, attention_mask):
    B, S = input_ids.shape
    BS = B * S

    # ---- embeddings (tiny gather/sum is glue in plain JAX) ----
    emb = (
        jnp.take(params["word_emb"], input_ids, axis=0)
        + params["pos_emb"][:S][None, :, :]
        + params["type_emb"][0][None, None, :]          # token_type_ids == 0 (HF default)
    ).reshape(BS, HIDDEN).astype(jnp.float32)

    # ---- combined additive attention mask [BS, BS] ----
    # within a batch: HF-style -10000 for padded keys; across batches: -1e9
    pad = (1.0 - attention_mask.astype(jnp.float32)) * -10000.0         # [B, S]
    batch_of = jnp.repeat(jnp.arange(B), S)                              # [BS]
    same_batch = batch_of[:, None] == batch_of[None, :]                  # [BS, BS]
    mask = jnp.where(same_batch, pad.reshape(BS)[None, :], -1e9).astype(jnp.float32)

    # ---- [CLS] row-selection matrix [B, BS] ----
    cls_sel = jnp.zeros((B, BS), jnp.float32).at[
        jnp.arange(B), jnp.arange(B) * S].set(1.0)

    pk = _pack_params(params)

    # Single fused, gridless, VMEM-resident kernel.
    # NOTE(v7x): if batch size grows, add a grid axis over B with
    # dimension_semantics=("parallel",) to use the second TensorCore.
    logits = pl.pallas_call(
        _fused_bert_kernel,
        out_shape=jax.ShapeDtypeStruct((B, HEAD_PAD), jnp.float32),
        in_specs=[_VMEM_SPEC] * 21,
        out_specs=_VMEM_SPEC,
    )(
        emb, mask, cls_sel,
        pk["eln_g"], pk["eln_b"],
        pk["wqkv"], pk["bqkv"], pk["wo"], pk["bo"],
        pk["ln1_g"], pk["ln1_b"],
        pk["w1"], pk["b1"], pk["w2"], pk["b2"],
        pk["ln2_g"], pk["ln2_b"],
        pk["pool_w"], pk["pool_b"], pk["head_w"], pk["head_b"],
    )

    violation = logits[:, 0:2]
    source = logits[:, 2:4]
    department = logits[:, 4:4 + NUM_DEPARTMENTS]
    skill = logits[:, 4 + NUM_DEPARTMENTS:4 + NUM_DEPARTMENTS + NUM_SKILLS]
    return violation, source, department, skill


# -------------------------------------------------------------------- main ---
if __name__ == "__main__":
    root = jax.random.PRNGKey(0)
    pkey, ikey = jax.random.split(root)

    params = init_params(pkey)

    B, S = 2, 8
    input_ids = jax.random.randint(ikey, (B, S), 0, VOCAB, dtype=jnp.int32)
    attention_mask = jnp.ones((B, S), jnp.int32)

    fwd = jax.jit(multitask_bert_forward)
    outs = jax.block_until_ready(fwd(params, input_ids, attention_mask))

    v, s, d, sk = outs
    assert v.shape == (B, 2)
    assert s.shape == (B, 2)
    assert d.shape == (B, NUM_DEPARTMENTS)
    assert sk.shape == (B, NUM_SKILLS)
    assert all(bool(jnp.all(jnp.isfinite(o))) for o in outs)
    print("KERNEL_OK")
</pallas_src>

<mosaic_0001>
module attributes {stable_mosaic.version = 11 : i64} {
  func.func @_fused_bert_kernel(%arg0: memref<16x32xf32, #tpu.memory_space<vmem>>, %arg1: memref<16x16xf32, #tpu.memory_space<vmem>>, %arg2: memref<2x16xf32, #tpu.memory_space<vmem>>, %arg3: memref<1x32xf32, #tpu.memory_space<vmem>>, %arg4: memref<1x32xf32, #tpu.memory_space<vmem>>, %arg5: memref<2x32x96xf32, #tpu.memory_space<vmem>>, %arg6: memref<2x1x96xf32, #tpu.memory_space<vmem>>, %arg7: memref<2x32x32xf32, #tpu.memory_space<vmem>>, %arg8: memref<2x1x32xf32, #tpu.memory_space<vmem>>, %arg9: memref<2x1x32xf32, #tpu.memory_space<vmem>>, %arg10: memref<2x1x32xf32, #tpu.memory_space<vmem>>, %arg11: memref<2x32x64xf32, #tpu.memory_space<vmem>>, %arg12: memref<2x1x64xf32, #tpu.memory_space<vmem>>, %arg13: memref<2x64x32xf32, #tpu.memory_space<vmem>>, %arg14: memref<2x1x32xf32, #tpu.memory_space<vmem>>, %arg15: memref<2x1x32xf32, #tpu.memory_space<vmem>>, %arg16: memref<2x1x32xf32, #tpu.memory_space<vmem>>, %arg17: memref<32x32xf32, #tpu.memory_space<vmem>>, %arg18: memref<1x32xf32, #tpu.memory_space<vmem>>, %arg19: memref<32x128xf32, #tpu.memory_space<vmem>>, %arg20: memref<1x128xf32, #tpu.memory_space<vmem>>, %arg21: memref<2x128xf32, #tpu.memory_space<vmem>>) attributes {dimension_semantics = [], scalar_prefetch = 0 : i64, scratch_operands = 0 : i64, tpu.core_type = #tpu.core_type<tc>} {
    %c0 = arith.constant 0 : index
    %c0_0 = arith.constant 0 : index
    %0 = vector.load %arg0[%c0, %c0_0] : memref<16x32xf32, #tpu.memory_space<vmem>>, vector<16x32xf32>
    %c0_1 = arith.constant 0 : index
    %c0_2 = arith.constant 0 : index
    %1 = vector.load %arg3[%c0_1, %c0_2] : memref<1x32xf32, #tpu.memory_space<vmem>>, vector<1x32xf32>
    %c0_3 = arith.constant 0 : index
    %c0_4 = arith.constant 0 : index
    %2 = vector.load %arg4[%c0_3, %c0_4] : memref<1x32xf32, #tpu.memory_space<vmem>>, vector<1x32xf32>
    %cst = arith.constant dense<0.000000e+00> : vector<16xf32>
    %3 = vector.multi_reduction <add>, %0, %cst [1] : vector<16x32xf32> to vector<16xf32>
    %4 = vector.shape_cast %3 : vector<16xf32> to vector<16x1xf32>
    %cst_5 = arith.constant 3.200000e+01 : f32
    %5 = vector.broadcast %cst_5 : f32 to vector<16x1xf32>
    %6 = arith.divf %4, %5 : vector<16x1xf32>
    %7 = vector.broadcast %6 : vector<16x1xf32> to vector<16x32xf32>
    %8 = arith.subf %0, %7 : vector<16x32xf32>
    %9 = arith.mulf %8, %8 : vector<16x32xf32>
    %cst_6 = arith.constant dense<0.000000e+00> : vector<16xf32>
    %10 = vector.multi_reduction <add>, %9, %cst_6 [1] : vector<16x32xf32> to vector<16xf32>
    %11 = vector.shape_cast %10 : vector<16xf32> to vector<16x1xf32>
    %cst_7 = arith.constant 3.200000e+01 : f32
    %12 = vector.broadcast %cst_7 : f32 to vector<16x1xf32>
    %13 = arith.divf %11, %12 : vector<16x1xf32>
    %cst_8 = arith.constant 9.99999996E-13 : f32
    %14 = vector.broadcast %cst_8 : f32 to vector<16x1xf32>
    %15 = arith.addf %13, %14 : vector<16x1xf32>
    %16 = math.rsqrt %15 : vector<16x1xf32>
    %17 = vector.broadcast %16 : vector<16x1xf32> to vector<16x32xf32>
    %18 = arith.mulf %8, %17 : vector<16x32xf32>
    %19 = vector.broadcast %1 : vector<1x32xf32> to vector<16x32xf32>
    %20 = arith.mulf %18, %19 : vector<16x32xf32>
    %21 = vector.broadcast %2 : vector<1x32xf32> to vector<16x32xf32>
    %22 = arith.addf %20, %21 : vector<16x32xf32>
    %c0_9 = arith.constant 0 : index
    %c0_10 = arith.constant 0 : index
    %23 = vector.load %arg1[%c0_9, %c0_10] : memref<16x16xf32, #tpu.memory_space<vmem>>, vector<16x16xf32>
    %c0_11 = arith.constant 0 : index
    %c0_12 = arith.constant 0 : index
    %c0_13 = arith.constant 0 : index
    %24 = vector.load %arg5[%c0_11, %c0_12, %c0_13] : memref<2x32x96xf32, #tpu.memory_space<vmem>>, vector<1x32x96xf32>
    %25 = vector.shape_cast %24 : vector<1x32x96xf32> to vector<32x96xf32>
    %cst_14 = arith.constant dense<0.000000e+00> : vector<16x96xf32>
    %26 = tpu.matmul %22, %25, %cst_14 {dimension_numbers = #tpu.dot_dimension_numbers<[1], [0], [0], [1], [0, 0, 1, 1], [], []>} : vector<16x32xf32>, vector<32x96xf32>, vector<16x96xf32> -> vector<16x96xf32>
    %c0_15 = arith.constant 0 : index
    %c0_16 = arith.constant 0 : index
    %c0_17 = arith.constant 0 : index
    %27 = vector.load %arg6[%c0_15, %c0_16, %c0_17] : memref<2x1x96xf32, #tpu.memory_space<vmem>>, vector<1x1x96xf32>
    %28 = vector.shape_cast %27 : vector<1x1x96xf32> to vector<1x96xf32>
    %29 = vector.broadcast %28 : vector<1x96xf32> to vector<16x96xf32>
    %30 = arith.addf %26, %29 : vector<16x96xf32>
    %c0_18 = arith.constant 0 : index
    %c0_19 = arith.constant 0 : index
    %c0_20 = arith.constant 0 : index
    %31 = vector.load %arg7[%c0_18, %c0_19, %c0_20] : memref<2x32x32xf32, #tpu.memory_space<vmem>>, vector<1x32x32xf32>
    %32 = vector.shape_cast %31 : vector<1x32x32xf32> to vector<32x32xf32>
    %33 = vector.extract_strided_slice %30 {offsets = [0, 0], sizes = [16, 16], strides = [1, 1]} : vector<16x96xf32> to vector<16x16xf32>
    %34 = vector.extract_strided_slice %30 {offsets = [0, 32], sizes = [16, 16], strides = [1, 1]} : vector<16x96xf32> to vector<16x16xf32>
    %35 = vector.extract_strided_slice %30 {offsets = [0, 64], sizes = [16, 16], strides = [1, 1]} : vector<16x96xf32> to vector<16x16xf32>
    %cst_21 = arith.constant dense<0.000000e+00> : vector<16x16xf32>
    %36 = tpu.matmul %33, %34, %cst_21 {dimension_numbers = #tpu.dot_dimension_numbers<[1], [1], [0], [0], [0, 0, 1, 0], [], []>} : vector<16x16xf32>, vector<16x16xf32>, vector<16x16xf32> -> vector<16x16xf32>
    %37 = arith.addf %36, %23 : vector<16x16xf32>
    %cst_22 = arith.constant dense<0xFF800000> : vector<16xf32>
    %38 = vector.multi_reduction <maximumf>, %37, %cst_22 [1] : vector<16x16xf32> to vector<16xf32>
    %39 = vector.shape_cast %38 : vector<16xf32> to vector<16x1xf32>
    %40 = vector.broadcast %39 : vector<16x1xf32> to vector<16x16xf32>
    %41 = arith.subf %37, %40 : vector<16x16xf32>
    %42 = math.exp %41 : vector<16x16xf32>
    %cst_23 = arith.constant dense<0.000000e+00> : vector<16xf32>
    %43 = vector.multi_reduction <add>, %42, %cst_23 [1] : vector<16x16xf32> to vector<16xf32>
    %44 = vector.shape_cast %43 : vector<16xf32> to vector<16x1xf32>
    %45 = tpu.reciprocal %44 {approx = true} : vector<16x1xf32> -> vector<16x1xf32>
    %46 = vector.broadcast %45 : vector<16x1xf32> to vector<16x16xf32>
    %47 = arith.mulf %42, %46 : vector<16x16xf32>
    %cst_24 = arith.constant dense<0.000000e+00> : vector<16x16xf32>
    %48 = tpu.matmul %47, %35, %cst_24 {dimension_numbers = #tpu.dot_dimension_numbers<[1], [0], [0], [1], [0, 0, 1, 1], [], []>} : vector<16x16xf32>, vector<16x16xf32>, vector<16x16xf32> -> vector<16x16xf32>
    %49 = vector.extract_strided_slice %32 {offsets = [0, 0], sizes = [16, 32], strides = [1, 1]} : vector<32x32xf32> to vector<16x32xf32>
    %cst_25 = arith.constant dense<0.000000e+00> : vector<16x32xf32>
    %50 = tpu.matmul %48, %49, %cst_25 {dimension_numbers = #tpu.dot_dimension_numbers<[1], [0], [0], [1], [0, 0, 1, 1], [], []>} : vector<16x16xf32>, vector<16x32xf32>, vector<16x32xf32> -> vector<16x32xf32>
    %51 = vector.extract_strided_slice %30 {offsets = [0, 16], sizes = [16, 16], strides = [1, 1]} : vector<16x96xf32> to vector<16x16xf32>
    %52 = vector.extract_strided_slice %30 {offsets = [0, 48], sizes = [16, 16], strides = [1, 1]} : vector<16x96xf32> to vector<16x16xf32>
    %53 = vector.extract_strided_slice %30 {offsets = [0, 80], sizes = [16, 16], strides = [1, 1]} : vector<16x96xf32> to vector<16x16xf32>
    %cst_26 = arith.constant dense<0.000000e+00> : vector<16x16xf32>
    %54 = tpu.matmul %51, %52, %cst_26 {dimension_numbers = #tpu.dot_dimension_numbers<[1], [1], [0], [0], [0, 0, 1, 0], [], []>} : vector<16x16xf32>, vector<16x16xf32>, vector<16x16xf32> -> vector<16x16xf32>
    %55 = arith.addf %54, %23 : vector<16x16xf32>
    %cst_27 = arith.constant dense<0xFF800000> : vector<16xf32>
    %56 = vector.multi_reduction <maximumf>, %55, %cst_27 [1] : vector<16x16xf32> to vector<16xf32>
    %57 = vector.shape_cast %56 : vector<16xf32> to vector<16x1xf32>
    %58 = vector.broadcast %57 : vector<16x1xf32> to vector<16x16xf32>
    %59 = arith.subf %55, %58 : vector<16x16xf32>
    %60 = math.exp %59 : vector<16x16xf32>
    %cst_28 = arith.constant dense<0.000000e+00> : vector<16xf32>
    %61 = vector.multi_reduction <add>, %60, %cst_28 [1] : vector<16x16xf32> to vector<16xf32>
    %62 = vector.shape_cast %61 : vector<16xf32> to vector<16x1xf32>
    %63 = tpu.reciprocal %62 {approx = true} : vector<16x1xf32> -> vector<16x1xf32>
    %64 = vector.broadcast %63 : vector<16x1xf32> to vector<16x16xf32>
    %65 = arith.mulf %60, %64 : vector<16x16xf32>
    %cst_29 = arith.constant dense<0.000000e+00> : vector<16x16xf32>
    %66 = tpu.matmul %65, %53, %cst_29 {dimension_numbers = #tpu.dot_dimension_numbers<[1], [0], [0], [1], [0, 0, 1, 1], [], []>} : vector<16x16xf32>, vector<16x16xf32>, vector<16x16xf32> -> vector<16x16xf32>
    %67 = vector.extract_strided_slice %32 {offsets = [16, 0], sizes = [16, 32], strides = [1, 1]} : vector<32x32xf32> to vector<16x32xf32>
    %cst_30 = arith.constant dense<0.000000e+00> : vector<16x32xf32>
    %68 = tpu.matmul %66, %67, %cst_30 {dimension_numbers = #tpu.dot_dimension_numbers<[1], [0], [0], [1], [0, 0, 1, 1], [], []>} : vector<16x16xf32>, vector<16x32xf32>, vector<16x32xf32> -> vector<16x32xf32>
    %69 = arith.addf %50, %68 : vector<16x32xf32>
    %c0_31 = arith.constant 0 : index
    %c0_32 = arith.constant 0 : index
    %c0_33 = arith.constant 0 : index
    %70 = vector.load %arg8[%c0_31, %c0_32, %c0_33] : memref<2x1x32xf32, #tpu.memory_space<vmem>>, vector<1x1x32xf32>
    %71 = vector.shape_cast %70 : vector<1x1x32xf32> to vector<1x32xf32>
    %72 = vector.broadcast %71 : vector<1x32xf32> to vector<16x32xf32>
    %73 = arith.addf %69, %72 : vector<16x32xf32>
    %74 = arith.addf %22, %73 : vector<16x32xf32>
    %c0_34 = arith.constant 0 : index
    %c0_35 = arith.constant 0 : index
    %c0_36 = arith.constant 0 : index
    %75 = vector.load %arg9[%c0_34, %c0_35, %c0_36] : memref<2x1x32xf32, #tpu.memory_space<vmem>>, vector<1x1x32xf32>
    %76 = vector.shape_cast %75 : vector<1x1x32xf32> to vector<1x32xf32>
    %c0_37 = arith.constant 0 : index
    %c0_38 = arith.constant 0 : index
    %c0_39 = arith.constant 0 : index
    %77 = vector.load %arg10[%c0_37, %c0_38, %c0_39] : memref<2x1x32xf32, #tpu.memory_space<vmem>>, vector<1x1x32xf32>
    %78 = vector.shape_cast %77 : vector<1x1x32xf32> to vector<1x32xf32>
    %cst_40 = arith.constant dense<0.000000e+00> : vector<16xf32>
    %79 = vector.multi_reduction <add>, %74, %cst_40 [1] : vector<16x32xf32> to vector<16xf32>
    %80 = vector.shape_cast %79 : vector<16xf32> to vector<16x1xf32>
    %cst_41 = arith.constant 3.200000e+01 : f32
    %81 = vector.broadcast %cst_41 : f32 to vector<16x1xf32>
    %82 = arith.divf %80, %81 : vector<16x1xf32>
    %83 = vector.broadcast %82 : vector<16x1xf32> to vector<16x32xf32>
    %84 = arith.subf %74, %83 : vector<16x32xf32>
    %85 = arith.mulf %84, %84 : vector<16x32xf32>
    %cst_42 = arith.constant dense<0.000000e+00> : vector<16xf32>
    %86 = vector.multi_reduction <add>, %85, %cst_42 [1] : vector<16x32xf32> to vector<16xf32>
    %87 = vector.shape_cast %86 : vector<16xf32> to vector<16x1xf32>
    %cst_43 = arith.constant 3.200000e+01 : f32
    %88 = vector.broadcast %cst_43 : f32 to vector<16x1xf32>
    %89 = arith.divf %87, %88 : vector<16x1xf32>
    %cst_44 = arith.constant 9.99999996E-13 : f32
    %90 = vector.broadcast %cst_44 : f32 to vector<16x1xf32>
    %91 = arith.addf %89, %90 : vector<16x1xf32>
    %92 = math.rsqrt %91 : vector<16x1xf32>
    %93 = vector.broadcast %92 : vector<16x1xf32> to vector<16x32xf32>
    %94 = arith.mulf %84, %93 : vector<16x32xf32>
    %95 = vector.broadcast %76 : vector<1x32xf32> to vector<16x32xf32>
    %96 = arith.mulf %94, %95 : vector<16x32xf32>
    %97 = vector.broadcast %78 : vector<1x32xf32> to vector<16x32xf32>
    %98 = arith.addf %96, %97 : vector<16x32xf32>
    %c0_45 = arith.constant 0 : index
    %c0_46 = arith.constant 0 : index
    %c0_47 = arith.constant 0 : index
    %99 = vector.load %arg11[%c0_45, %c0_46, %c0_47] : memref<2x32x64xf32, #tpu.memory_space<vmem>>, vector<1x32x64xf32>
    %100 = vector.shape_cast %99 : vector<1x32x64xf32> to vector<32x64xf32>
    %cst_48 = arith.constant dense<0.000000e+00> : vector<16x64xf32>
    %101 = tpu.matmul %98, %100, %cst_48 {dimension_numbers = #tpu.dot_dimension_numbers<[1], [0], [0], [1], [0, 0, 1, 1], [], []>} : vector<16x32xf32>, vector<32x64xf32>, vector<16x64xf32> -> vector<16x64xf32>
    %c0_49 = arith.constant 0 : index
    %c0_50 = arith.constant 0 : index
    %c0_51 = arith.constant 0 : index
    %102 = vector.load %arg12[%c0_49, %c0_50, %c0_51] : memref<2x1x64xf32, #tpu.memory_space<vmem>>, vector<1x1x64xf32>
    %103 = vector.shape_cast %102 : vector<1x1x64xf32> to vector<1x64xf32>
    %104 = vector.broadcast %103 : vector<1x64xf32> to vector<16x64xf32>
    %105 = arith.addf %101, %104 : vector<16x64xf32>
    %cst_52 = arith.constant 5.000000e-01 : f32
    %106 = vector.broadcast %cst_52 : f32 to vector<16x64xf32>
    %107 = arith.mulf %106, %105 : vector<16x64xf32>
    %cst_53 = arith.constant 4.471500e-02 : f32
    %108 = vector.broadcast %cst_53 : f32 to vector<16x64xf32>
    %109 = arith.mulf %108, %105 : vector<16x64xf32>
    %110 = arith.mulf %109, %105 : vector<16x64xf32>
    %111 = arith.mulf %110, %105 : vector<16x64xf32>
    %112 = arith.addf %105, %111 : vector<16x64xf32>
    %cst_54 = arith.constant 0.797884583 : f32
    %113 = vector.broadcast %cst_54 : f32 to vector<16x64xf32>
    %114 = arith.mulf %113, %112 : vector<16x64xf32>
    %115 = math.tanh %114 : vector<16x64xf32>
    %cst_55 = arith.constant 1.000000e+00 : f32
    %116 = vector.broadcast %cst_55 : f32 to vector<16x64xf32>
    %117 = arith.addf %116, %115 : vector<16x64xf32>
    %118 = arith.mulf %107, %117 : vector<16x64xf32>
    %c0_56 = arith.constant 0 : index
    %c0_57 = arith.constant 0 : index
    %c0_58 = arith.constant 0 : index
    %119 = vector.load %arg13[%c0_56, %c0_57, %c0_58] : memref<2x64x32xf32, #tpu.memory_space<vmem>>, vector<1x64x32xf32>
    %120 = vector.shape_cast %119 : vector<1x64x32xf32> to vector<64x32xf32>
    %cst_59 = arith.constant dense<0.000000e+00> : vector<16x32xf32>
    %121 = tpu.matmul %118, %120, %cst_59 {dimension_numbers = #tpu.dot_dimension_numbers<[1], [0], [0], [1], [0, 0, 1, 1], [], []>} : vector<16x64xf32>, vector<64x32xf32>, vector<16x32xf32> -> vector<16x32xf32>
    %c0_60 = arith.constant 0 : index
    %c0_61 = arith.constant 0 : index
    %c0_62 = arith.constant 0 : index
    %122 = vector.load %arg14[%c0_60, %c0_61, %c0_62] : memref<2x1x32xf32, #tpu.memory_space<vmem>>, vector<1x1x32xf32>
    %123 = vector.shape_cast %122 : vector<1x1x32xf32> to vector<1x32xf32>
    %124 = vector.broadcast %123 : vector<1x32xf32> to vector<16x32xf32>
    %125 = arith.addf %121, %124 : vector<16x32xf32>
    %126 = arith.addf %98, %125 : vector<16x32xf32>
    %c0_63 = arith.constant 0 : index
    %c0_64 = arith.constant 0 : index
    %c0_65 = arith.constant 0 : index
    %127 = vector.load %arg15[%c0_63, %c0_64, %c0_65] : memref<2x1x32xf32, #tpu.memory_space<vmem>>, vector<1x1x32xf32>
    %128 = vector.shape_cast %127 : vector<1x1x32xf32> to vector<1x32xf32>
    %c0_66 = arith.constant 0 : index
    %c0_67 = arith.constant 0 : index
    %c0_68 = arith.constant 0 : index
    %129 = vector.load %arg16[%c0_66, %c0_67, %c0_68] : memref<2x1x32xf32, #tpu.memory_space<vmem>>, vector<1x1x32xf32>
    %130 = vector.shape_cast %129 : vector<1x1x32xf32> to vector<1x32xf32>
    %cst_69 = arith.constant dense<0.000000e+00> : vector<16xf32>
    %131 = vector.multi_reduction <add>, %126, %cst_69 [1] : vector<16x32xf32> to vector<16xf32>
    %132 = vector.shape_cast %131 : vector<16xf32> to vector<16x1xf32>
    %cst_70 = arith.constant 3.200000e+01 : f32
    %133 = vector.broadcast %cst_70 : f32 to vector<16x1xf32>
    %134 = arith.divf %132, %133 : vector<16x1xf32>
    %135 = vector.broadcast %134 : vector<16x1xf32> to vector<16x32xf32>
    %136 = arith.subf %126, %135 : vector<16x32xf32>
    %137 = arith.mulf %136, %136 : vector<16x32xf32>
    %cst_71 = arith.constant dense<0.000000e+00> : vector<16xf32>
    %138 = vector.multi_reduction <add>, %137, %cst_71 [1] : vector<16x32xf32> to vector<16xf32>
    %139 = vector.shape_cast %138 : vector<16xf32> to vector<16x1xf32>
    %cst_72 = arith.constant 3.200000e+01 : f32
    %140 = vector.broadcast %cst_72 : f32 to vector<16x1xf32>
    %141 = arith.divf %139, %140 : vector<16x1xf32>
    %cst_73 = arith.constant 9.99999996E-13 : f32
    %142 = vector.broadcast %cst_73 : f32 to vector<16x1xf32>
    %143 = arith.addf %141, %142 : vector<16x1xf32>
    %144 = math.rsqrt %143 : vector<16x1xf32>
    %145 = vector.broadcast %144 : vector<16x1xf32> to vector<16x32xf32>
    %146 = arith.mulf %136, %145 : vector<16x32xf32>
    %147 = vector.broadcast %128 : vector<1x32xf32> to vector<16x32xf32>
    %148 = arith.mulf %146, %147 : vector<16x32xf32>
    %149 = vector.broadcast %130 : vector<1x32xf32> to vector<16x32xf32>
    %150 = arith.addf %148, %149 : vector<16x32xf32>
    %c1 = arith.constant 1 : index
    %c0_74 = arith.constant 0 : index
    %c0_75 = arith.constant 0 : index
    %151 = vector.load %arg5[%c1, %c0_74, %c0_75] : memref<2x32x96xf32, #tpu.memory_space<vmem>>, vector<1x32x96xf32>
    %152 = vector.shape_cast %151 : vector<1x32x96xf32> to vector<32x96xf32>
    %cst_76 = arith.constant dense<0.000000e+00> : vector<16x96xf32>
    %153 = tpu.matmul %150, %152, %cst_76 {dimension_numbers = #tpu.dot_dimension_numbers<[1], [0], [0], [1], [0, 0, 1, 1], [], []>} : vector<16x32xf32>, vector<32x96xf32>, vector<16x96xf32> -> vector<16x96xf32>
    %c1_77 = arith.constant 1 : index
    %c0_78 = arith.constant 0 : index
    %c0_79 = arith.constant 0 : index
    %154 = vector.load %arg6[%c1_77, %c0_78, %c0_79] : memref<2x1x96xf32, #tpu.memory_space<vmem>>, vector<1x1x96xf32>
    %155 = vector.shape_cast %154 : vector<1x1x96xf32> to vector<1x96xf32>
    %156 = vector.broadcast %155 : vector<1x96xf32> to vector<16x96xf32>
    %157 = arith.addf %153, %156 : vector<16x96xf32>
    %c1_80 = arith.constant 1 : index
    %c0_81 = arith.constant 0 : index
    %c0_82 = arith.constant 0 : index
    %158 = vector.load %arg7[%c1_80, %c0_81, %c0_82] : memref<2x32x32xf32, #tpu.memory_space<vmem>>, vector<1x32x32xf32>
    %159 = vector.shape_cast %158 : vector<1x32x32xf32> to vector<32x32xf32>
    %160 = vector.extract_strided_slice %157 {offsets = [0, 0], sizes = [16, 16], strides = [1, 1]} : vector<16x96xf32> to vector<16x16xf32>
    %161 = vector.extract_strided_slice %157 {offsets = [0, 32], sizes = [16, 16], strides = [1, 1]} : vector<16x96xf32> to vector<16x16xf32>
    %162 = vector.extract_strided_slice %157 {offsets = [0, 64], sizes = [16, 16], strides = [1, 1]} : vector<16x96xf32> to vector<16x16xf32>
    %cst_83 = arith.constant dense<0.000000e+00> : vector<16x16xf32>
    %163 = tpu.matmul %160, %161, %cst_83 {dimension_numbers = #tpu.dot_dimension_numbers<[1], [1], [0], [0], [0, 0, 1, 0], [], []>} : vector<16x16xf32>, vector<16x16xf32>, vector<16x16xf32> -> vector<16x16xf32>
    %164 = arith.addf %163, %23 : vector<16x16xf32>
    %cst_84 = arith.constant dense<0xFF800000> : vector<16xf32>
    %165 = vector.multi_reduction <maximumf>, %164, %cst_84 [1] : vector<16x16xf32> to vector<16xf32>
    %166 = vector.shape_cast %165 : vector<16xf32> to vector<16x1xf32>
    %167 = vector.broadcast %166 : vector<16x1xf32> to vector<16x16xf32>
    %168 = arith.subf %164, %167 : vector<16x16xf32>
    %169 = math.exp %168 : vector<16x16xf32>
    %cst_85 = arith.constant dense<0.000000e+00> : vector<16xf32>
    %170 = vector.multi_reduction <add>, %169, %cst_85 [1] : vector<16x16xf32> to vector<16xf32>
    %171 = vector.shape_cast %170 : vector<16xf32> to vector<16x1xf32>
    %172 = tpu.reciprocal %171 {approx = true} : vector<16x1xf32> -> vector<16x1xf32>
    %173 = vector.broadcast %172 : vector<16x1xf32> to vector<16x16xf32>
    %174 = arith.mulf %169, %173 : vector<16x16xf32>
    %cst_86 = arith.constant dense<0.000000e+00> : vector<16x16xf32>
    %175 = tpu.matmul %174, %162, %cst_86 {dimension_numbers = #tpu.dot_dimension_numbers<[1], [0], [0], [1], [0, 0, 1, 1], [], []>} : vector<16x16xf32>, vector<16x16xf32>, vector<16x16xf32> -> vector<16x16xf32>
    %176 = vector.extract_strided_slice %159 {offsets = [0, 0], sizes = [16, 32], strides = [1, 1]} : vector<32x32xf32> to vector<16x32xf32>
    %cst_87 = arith.constant dense<0.000000e+00> : vector<16x32xf32>
    %177 = tpu.matmul %175, %176, %cst_87 {dimension_numbers = #tpu.dot_dimension_numbers<[1], [0], [0], [1], [0, 0, 1, 1], [], []>} : vector<16x16xf32>, vector<16x32xf32>, vector<16x32xf32> -> vector<16x32xf32>
    %178 = vector.extract_strided_slice %157 {offsets = [0, 16], sizes = [16, 16], strides = [1, 1]} : vector<16x96xf32> to vector<16x16xf32>
    %179 = vector.extract_strided_slice %157 {offsets = [0, 48], sizes = [16, 16], strides = [1, 1]} : vector<16x96xf32> to vector<16x16xf32>
    %180 = vector.extract_strided_slice %157 {offsets = [0, 80], sizes = [16, 16], strides = [1, 1]} : vector<16x96xf32> to vector<16x16xf32>
    %cst_88 = arith.constant dense<0.000000e+00> : vector<16x16xf32>
    %181 = tpu.matmul %178, %179, %cst_88 {dimension_numbers = #tpu.dot_dimension_numbers<[1], [1], [0], [0], [0, 0, 1, 0], [], []>} : vector<16x16xf32>, vector<16x16xf32>, vector<16x16xf32> -> vector<16x16xf32>
    %182 = arith.addf %181, %23 : vector<16x16xf32>
    %cst_89 = arith.constant dense<0xFF800000> : vector<16xf32>
    %183 = vector.multi_reduction <maximumf>, %182, %cst_89 [1] : vector<16x16xf32> to vector<16xf32>
    %184 = vector.shape_cast %183 : vector<16xf32> to vector<16x1xf32>
    %185 = vector.broadcast %184 : vector<16x1xf32> to vector<16x16xf32>
    %186 = arith.subf %182, %185 : vector<16x16xf32>
    %187 = math.exp %186 : vector<16x16xf32>
    %cst_90 = arith.constant dense<0.000000e+00> : vector<16xf32>
    %188 = vector.multi_reduction <add>, %187, %cst_90 [1] : vector<16x16xf32> to vector<16xf32>
    %189 = vector.shape_cast %188 : vector<16xf32> to vector<16x1xf32>
    %190 = tpu.reciprocal %189 {approx = true} : vector<16x1xf32> -> vector<16x1xf32>
    %191 = vector.broadcast %190 : vector<16x1xf32> to vector<16x16xf32>
    %192 = arith.mulf %187, %191 : vector<16x16xf32>
    %cst_91 = arith.constant dense<0.000000e+00> : vector<16x16xf32>
    %193 = tpu.matmul %192, %180, %cst_91 {dimension_numbers = #tpu.dot_dimension_numbers<[1], [0], [0], [1], [0, 0, 1, 1], [], []>} : vector<16x16xf32>, vector<16x16xf32>, vector<16x16xf32> -> vector<16x16xf32>
    %194 = vector.extract_strided_slice %159 {offsets = [16, 0], sizes = [16, 32], strides = [1, 1]} : vector<32x32xf32> to vector<16x32xf32>
    %cst_92 = arith.constant dense<0.000000e+00> : vector<16x32xf32>
    %195 = tpu.matmul %193, %194, %cst_92 {dimension_numbers = #tpu.dot_dimension_numbers<[1], [0], [0], [1], [0, 0, 1, 1], [], []>} : vector<16x16xf32>, vector<16x32xf32>, vector<16x32xf32> -> vector<16x32xf32>
    %196 = arith.addf %177, %195 : vector<16x32xf32>
    %c1_93 = arith.constant 1 : index
    %c0_94 = arith.constant 0 : index
    %c0_95 = arith.constant 0 : index
    %197 = vector.load %arg8[%c1_93, %c0_94, %c0_95] : memref<2x1x32xf32, #tpu.memory_space<vmem>>, vector<1x1x32xf32>
    %198 = vector.shape_cast %197 : vector<1x1x32xf32> to vector<1x32xf32>
    %199 = vector.broadcast %198 : vector<1x32xf32> to vector<16x32xf32>
    %200 = arith.addf %196, %199 : vector<16x32xf32>
    %201 = arith.addf %150, %200 : vector<16x32xf32>
    %c1_96 = arith.constant 1 : index
    %c0_97 = arith.constant 0 : index
    %c0_98 = arith.constant 0 : index
    %202 = vector.load %arg9[%c1_96, %c0_97, %c0_98] : memref<2x1x32xf32, #tpu.memory_space<vmem>>, vector<1x1x32xf32>
    %203 = vector.shape_cast %202 : vector<1x1x32xf32> to vector<1x32xf32>
    %c1_99 = arith.constant 1 : index
    %c0_100 = arith.constant 0 : index
    %c0_101 = arith.constant 0 : index
    %204 = vector.load %arg10[%c1_99, %c0_100, %c0_101] : memref<2x1x32xf32, #tpu.memory_space<vmem>>, vector<1x1x32xf32>
    %205 = vector.shape_cast %204 : vector<1x1x32xf32> to vector<1x32xf32>
    %cst_102 = arith.constant dense<0.000000e+00> : vector<16xf32>
    %206 = vector.multi_reduction <add>, %201, %cst_102 [1] : vector<16x32xf32> to vector<16xf32>
    %207 = vector.shape_cast %206 : vector<16xf32> to vector<16x1xf32>
    %cst_103 = arith.constant 3.200000e+01 : f32
    %208 = vector.broadcast %cst_103 : f32 to vector<16x1xf32>
    %209 = arith.divf %207, %208 : vector<16x1xf32>
    %210 = vector.broadcast %209 : vector<16x1xf32> to vector<16x32xf32>
    %211 = arith.subf %201, %210 : vector<16x32xf32>
    %212 = arith.mulf %211, %211 : vector<16x32xf32>
    %cst_104 = arith.constant dense<0.000000e+00> : vector<16xf32>
    %213 = vector.multi_reduction <add>, %212, %cst_104 [1] : vector<16x32xf32> to vector<16xf32>
    %214 = vector.shape_cast %213 : vector<16xf32> to vector<16x1xf32>
    %cst_105 = arith.constant 3.200000e+01 : f32
    %215 = vector.broadcast %cst_105 : f32 to vector<16x1xf32>
    %216 = arith.divf %214, %215 : vector<16x1xf32>
    %cst_106 = arith.constant 9.99999996E-13 : f32
    %217 = vector.broadcast %cst_106 : f32 to vector<16x1xf32>
    %218 = arith.addf %216, %217 : vector<16x1xf32>
    %219 = math.rsqrt %218 : vector<16x1xf32>
    %220 = vector.broadcast %219 : vector<16x1xf32> to vector<16x32xf32>
    %221 = arith.mulf %211, %220 : vector<16x32xf32>
    %222 = vector.broadcast %203 : vector<1x32xf32> to vector<16x32xf32>
    %223 = arith.mulf %221, %222 : vector<16x32xf32>
    %224 = vector.broadcast %205 : vector<1x32xf32> to vector<16x32xf32>
    %225 = arith.addf %223, %224 : vector<16x32xf32>
    %c1_107 = arith.constant 1 : index
    %c0_108 = arith.constant 0 : index
    %c0_109 = arith.constant 0 : index
    %226 = vector.load %arg11[%c1_107, %c0_108, %c0_109] : memref<2x32x64xf32, #tpu.memory_space<vmem>>, vector<1x32x64xf32>
    %227 = vector.shape_cast %226 : vector<1x32x64xf32> to vector<32x64xf32>
    %cst_110 = arith.constant dense<0.000000e+00> : vector<16x64xf32>
    %228 = tpu.matmul %225, %227, %cst_110 {dimension_numbers = #tpu.dot_dimension_numbers<[1], [0], [0], [1], [0, 0, 1, 1], [], []>} : vector<16x32xf32>, vector<32x64xf32>, vector<16x64xf32> -> vector<16x64xf32>
    %c1_111 = arith.constant 1 : index
    %c0_112 = arith.constant 0 : index
    %c0_113 = arith.constant 0 : index
    %229 = vector.load %arg12[%c1_111, %c0_112, %c0_113] : memref<2x1x64xf32, #tpu.memory_space<vmem>>, vector<1x1x64xf32>
    %230 = vector.shape_cast %229 : vector<1x1x64xf32> to vector<1x64xf32>
    %231 = vector.broadcast %230 : vector<1x64xf32> to vector<16x64xf32>
    %232 = arith.addf %228, %231 : vector<16x64xf32>
    %cst_114 = arith.constant 5.000000e-01 : f32
    %233 = vector.broadcast %cst_114 : f32 to vector<16x64xf32>
    %234 = arith.mulf %233, %232 : vector<16x64xf32>
    %cst_115 = arith.constant 4.471500e-02 : f32
    %235 = vector.broadcast %cst_115 : f32 to vector<16x64xf32>
    %236 = arith.mulf %235, %232 : vector<16x64xf32>
    %237 = arith.mulf %236, %232 : vector<16x64xf32>
    %238 = arith.mulf %237, %232 : vector<16x64xf32>
    %239 = arith.addf %232, %238 : vector<16x64xf32>
    %cst_116 = arith.constant 0.797884583 : f32
    %240 = vector.broadcast %cst_116 : f32 to vector<16x64xf32>
    %241 = arith.mulf %240, %239 : vector<16x64xf32>
    %242 = math.tanh %241 : vector<16x64xf32>
    %cst_117 = arith.constant 1.000000e+00 : f32
    %243 = vector.broadcast %cst_117 : f32 to vector<16x64xf32>
    %244 = arith.addf %243, %242 : vector<16x64xf32>
    %245 = arith.mulf %234, %244 : vector<16x64xf32>
    %c1_118 = arith.constant 1 : index
    %c0_119 = arith.constant 0 : index
    %c0_120 = arith.constant 0 : index
    %246 = vector.load %arg13[%c1_118, %c0_119, %c0_120] : memref<2x64x32xf32, #tpu.memory_space<vmem>>, vector<1x64x32xf32>
    %247 = vector.shape_cast %246 : vector<1x64x32xf32> to vector<64x32xf32>
    %cst_121 = arith.constant dense<0.000000e+00> : vector<16x32xf32>
    %248 = tpu.matmul %245, %247, %cst_121 {dimension_numbers = #tpu.dot_dimension_numbers<[1], [0], [0], [1], [0, 0, 1, 1], [], []>} : vector<16x64xf32>, vector<64x32xf32>, vector<16x32xf32> -> vector<16x32xf32>
    %c1_122 = arith.constant 1 : index
    %c0_123 = arith.constant 0 : index
    %c0_124 = arith.constant 0 : index
    %249 = vector.load %arg14[%c1_122, %c0_123, %c0_124] : memref<2x1x32xf32, #tpu.memory_space<vmem>>, vector<1x1x32xf32>
    %250 = vector.shape_cast %249 : vector<1x1x32xf32> to vector<1x32xf32>
    %251 = vector.broadcast %250 : vector<1x32xf32> to vector<16x32xf32>
    %252 = arith.addf %248, %251 : vector<16x32xf32>
    %253 = arith.addf %225, %252 : vector<16x32xf32>
    %c1_125 = arith.constant 1 : index
    %c0_126 = arith.constant 0 : index
    %c0_127 = arith.constant 0 : index
    %254 = vector.load %arg15[%c1_125, %c0_126, %c0_127] : memref<2x1x32xf32, #tpu.memory_space<vmem>>, vector<1x1x32xf32>
    %255 = vector.shape_cast %254 : vector<1x1x32xf32> to vector<1x32xf32>
    %c1_128 = arith.constant 1 : index
    %c0_129 = arith.constant 0 : index
    %c0_130 = arith.constant 0 : index
    %256 = vector.load %arg16[%c1_128, %c0_129, %c0_130] : memref<2x1x32xf32, #tpu.memory_space<vmem>>, vector<1x1x32xf32>
    %257 = vector.shape_cast %256 : vector<1x1x32xf32> to vector<1x32xf32>
    %cst_131 = arith.constant dense<0.000000e+00> : vector<16xf32>
    %258 = vector.multi_reduction <add>, %253, %cst_131 [1] : vector<16x32xf32> to vector<16xf32>
    %259 = vector.shape_cast %258 : vector<16xf32> to vector<16x1xf32>
    %cst_132 = arith.constant 3.200000e+01 : f32
    %260 = vector.broadcast %cst_132 : f32 to vector<16x1xf32>
    %261 = arith.divf %259, %260 : vector<16x1xf32>
    %262 = vector.broadcast %261 : vector<16x1xf32> to vector<16x32xf32>
    %263 = arith.subf %253, %262 : vector<16x32xf32>
    %264 = arith.mulf %263, %263 : vector<16x32xf32>
    %cst_133 = arith.constant dense<0.000000e+00> : vector<16xf32>
    %265 = vector.multi_reduction <add>, %264, %cst_133 [1] : vector<16x32xf32> to vector<16xf32>
    %266 = vector.shape_cast %265 : vector<16xf32> to vector<16x1xf32>
    %cst_134 = arith.constant 3.200000e+01 : f32
    %267 = vector.broadcast %cst_134 : f32 to vector<16x1xf32>
    %268 = arith.divf %266, %267 : vector<16x1xf32>
    %cst_135 = arith.constant 9.99999996E-13 : f32
    %269 = vector.broadcast %cst_135 : f32 to vector<16x1xf32>
    %270 = arith.addf %268, %269 : vector<16x1xf32>
    %271 = math.rsqrt %270 : vector<16x1xf32>
    %272 = vector.broadcast %271 : vector<16x1xf32> to vector<16x32xf32>
    %273 = arith.mulf %263, %272 : vector<16x32xf32>
    %274 = vector.broadcast %255 : vector<1x32xf32> to vector<16x32xf32>
    %275 = arith.mulf %273, %274 : vector<16x32xf32>
    %276 = vector.broadcast %257 : vector<1x32xf32> to vector<16x32xf32>
    %277 = arith.addf %275, %276 : vector<16x32xf32>
    %c0_136 = arith.constant 0 : index
    %c0_137 = arith.constant 0 : index
    %278 = vector.load %arg2[%c0_136, %c0_137] : memref<2x16xf32, #tpu.memory_space<vmem>>, vector<2x16xf32>
    %cst_138 = arith.constant dense<0.000000e+00> : vector<2x32xf32>
    %279 = tpu.matmul %278, %277, %cst_138 {dimension_numbers = #tpu.dot_dimension_numbers<[1], [0], [0], [1], [0, 0, 1, 1], [], []>} : vector<2x16xf32>, vector<16x32xf32>, vector<2x32xf32> -> vector<2x32xf32>
    %c0_139 = arith.constant 0 : index
    %c0_140 = arith.constant 0 : index
    %280 = vector.load %arg17[%c0_139, %c0_140] : memref<32x32xf32, #tpu.memory_space<vmem>>, vector<32x32xf32>
    %cst_141 = arith.constant dense<0.000000e+00> : vector<2x32xf32>
    %281 = tpu.matmul %279, %280, %cst_141 {dimension_numbers = #tpu.dot_dimension_numbers<[1], [0], [0], [1], [0, 0, 1, 1], [], []>} : vector<2x32xf32>, vector<32x32xf32>, vector<2x32xf32> -> vector<2x32xf32>
    %c0_142 = arith.constant 0 : index
    %c0_143 = arith.constant 0 : index
    %282 = vector.load %arg18[%c0_142, %c0_143] : memref<1x32xf32, #tpu.memory_space<vmem>>, vector<1x32xf32>
    %283 = vector.broadcast %282 : vector<1x32xf32> to vector<2x32xf32>
    %284 = arith.addf %281, %283 : vector<2x32xf32>
    %285 = math.tanh %284 : vector<2x32xf32>
    %c0_144 = arith.constant 0 : index
    %c0_145 = arith.constant 0 : index
    %286 = vector.load %arg19[%c0_144, %c0_145] : memref<32x128xf32, #tpu.memory_space<vmem>>, vector<32x128xf32>
    %cst_146 = arith.constant dense<0.000000e+00> : vector<2x128xf32>
    %287 = tpu.matmul %285, %286, %cst_146 {dimension_numbers = #tpu.dot_dimension_numbers<[1], [0], [0], [1], [0, 0, 1, 1], [], []>} : vector<2x32xf32>, vector<32x128xf32>, vector<2x128xf32> -> vector<2x128xf32>
    %c0_147 = arith.constant 0 : index
    %c0_148 = arith.constant 0 : index
    %288 = vector.load %arg20[%c0_147, %c0_148] : memref<1x128xf32, #tpu.memory_space<vmem>>, vector<1x128xf32>
    %289 = vector.broadcast %288 : vector<1x128xf32> to vector<2x128xf32>
    %290 = arith.addf %287, %289 : vector<2x128xf32>
    %c0_149 = arith.constant 0 : index
    %c0_150 = arith.constant 0 : index
    %291 = vector.load %arg21[%c0_149, %c0_150] : memref<2x128xf32, #tpu.memory_space<vmem>>, vector<2x128xf32>
    tpu.vector_store %arg21[%c0_149, %c0_150], %290 {strides = array<i32>} : memref<2x128xf32, #tpu.memory_space<vmem>>, vector<2x128xf32>,
    return
  }
}

</mosaic_0001>

<llo_original>
// kernel: multitask_bert_forward.1
$region0: #{multitask_bert_forward.1}
  #allocation0 [shape = 'u32[]', space=smem, size = 0x4, offset = 0x4, fixed_abs, tag = 'smem constant byte address 0x4 - core index']
  #allocation1 [shape = 'u32[72,128]{1,0:T(1,128)}', space=vmem, size = 0x9000, scoped, tag = 'internal scratch']
  %s0 = inlined_call_operand.vmem [shape: f32[16,32], index: 0, kind: input, shape index: {}]
  %s1 = inlined_call_operand.vmem [shape: f32[16,16], index: 1, kind: input, shape index: {}]
  %s2 = inlined_call_operand.vmem [shape: f32[2,16], index: 2, kind: input, shape index: {}]
  %s3 = inlined_call_operand.vmem [shape: f32[1,32], index: 3, kind: input, shape index: {}]
  %s4 = inlined_call_operand.vmem [shape: f32[1,32], index: 4, kind: input, shape index: {}]
  %s5 = inlined_call_operand.vmem [shape: f32[2,32,96], index: 5, kind: input, shape index: {}]
  %s6 = inlined_call_operand.vmem [shape: f32[2,1,96], index: 6, kind: input, shape index: {}]
  %s7 = inlined_call_operand.vmem [shape: f32[2,32,32], index: 7, kind: input, shape index: {}]
  %s8 = inlined_call_operand.vmem [shape: f32[2,1,32], index: 8, kind: input, shape index: {}]
  %s9 = inlined_call_operand.vmem [shape: f32[2,1,32], index: 9, kind: input, shape index: {}]
  %s10 = inlined_call_operand.vmem [shape: f32[2,1,32], index: 10, kind: input, shape index: {}]
  %s11 = inlined_call_operand.vmem [shape: f32[2,32,64], index: 11, kind: input, shape index: {}]
  %s12 = inlined_call_operand.vmem [shape: f32[2,1,64], index: 12, kind: input, shape index: {}]
  %s13 = inlined_call_operand.vmem [shape: f32[2,64,32], index: 13, kind: input, shape index: {}]
  %s14 = inlined_call_operand.vmem [shape: f32[2,1,32], index: 14, kind: input, shape index: {}]
  %s15 = inlined_call_operand.vmem [shape: f32[2,1,32], index: 15, kind: input, shape index: {}]
  %s16 = inlined_call_operand.vmem [shape: f32[2,1,32], index: 16, kind: input, shape index: {}]
  %s17 = inlined_call_operand.vmem [shape: f32[32,32], index: 17, kind: input, shape index: {}]
  %s18 = inlined_call_operand.vmem [shape: f32[1,32], index: 18, kind: input, shape index: {}]
  %s19 = inlined_call_operand.vmem [shape: f32[32,128], index: 19, kind: input, shape index: {}]
  %s20 = inlined_call_operand.vmem [shape: f32[1,128], index: 20, kind: input, shape index: {}]
  %s21 = inlined_call_operand.vmem [shape: f32[2,128], index: 21, kind: output, shape index: {}]
  %s22 = sld [smem:[#allocation0]]
  $region94: #{multitask_bert_forward.1} parent=0
    _
  %s24 = ssub.s32 1, %s22
  %s25 = scalar_select 0, %s24, %s22
  // Predicated region
  $region2: #{multitask_bert_forward.1} parent=0 // pred_check
    _
  $region3: #{multitask_bert_forward.1} parent=0 // pred_check_branch
    %27 = sbr.rel (0) target = $region5
  $region4: #{multitask_bert_forward.1} parent=0 // pred_region
    _
  $region5: #{multitask_bert_forward.1} parent=0 // pred_fallthru
    _
  // Predicated region
  $region6: #{multitask_bert_forward.1} parent=0 // pred_check
    _
  $region7: #{multitask_bert_forward.1} parent=0 // pred_check_branch
    %29 = sbr.rel (0) target = $region9
  $region8: #{multitask_bert_forward.1} parent=0 // pred_region
    _
  $region9: #{multitask_bert_forward.1} parent=0 // pred_fallthru
    _
  // Predicated region
  $region10: #{multitask_bert_forward.1} parent=0 // pred_check
    _
  $region11: #{multitask_bert_forward.1} parent=0 // pred_check_branch
    %31 = sbr.rel (0) target = $region13
  $region12: #{multitask_bert_forward.1} parent=0 // pred_region
    _
  $region13: #{multitask_bert_forward.1} parent=0 // pred_fallthru
    _
  // Predicated region
  $region14: #{multitask_bert_forward.1} parent=0 // pred_check
    _
  $region15: #{multitask_bert_forward.1} parent=0 // pred_check_branch
    %33 = sbr.rel (0) target = $region17
  $region16: #{multitask_bert_forward.1} parent=0 // pred_region
    _
  $region17: #{multitask_bert_forward.1} parent=0 // pred_fallthru
    _
  // Predicated region
  $region18: #{multitask_bert_forward.1} parent=0 // pred_check
    _
  $region19: #{multitask_bert_forward.1} parent=0 // pred_check_branch
    %35 = sbr.rel (0) target = $region21
  $region20: #{multitask_bert_forward.1} parent=0 // pred_region
    _
  $region21: #{multitask_bert_forward.1} parent=0 // pred_fallthru
    _
  // Predicated region
  $region22: #{multitask_bert_forward.1} parent=0 // pred_check
    _
  $region23: #{multitask_bert_forward.1} parent=0 // pred_check_branch
    %37 = sbr.rel (0) target = $region25
  $region24: #{multitask_bert_forward.1} parent=0 // pred_region
    _
  $region25: #{multitask_bert_forward.1} parent=0 // pred_fallthru
    _
  // Predicated region
  $region26: #{multitask_bert_forward.1} parent=0 // pred_check
    _
  $region27: #{multitask_bert_forward.1} parent=0 // pred_check_branch
    %39 = sbr.rel (0) target = $region29
  $region28: #{multitask_bert_forward.1} parent=0 // pred_region
    _
  $region29: #{multitask_bert_forward.1} parent=0 // pred_fallthru
    _
  // Predicated region
  $region30: #{multitask_bert_forward.1} parent=0 // pred_check
    _
  $region31: #{multitask_bert_forward.1} parent=0 // pred_check_branch
    %41 = sbr.rel (0) target = $region33
  $region32: #{multitask_bert_forward.1} parent=0 // pred_region
    _
  $region33: #{multitask_bert_forward.1} parent=0 // pred_fallthru
    _
  // Predicated region
  $region34: #{multitask_bert_forward.1} parent=0 // pred_check
    _
  $region35: #{multitask_bert_forward.1} parent=0 // pred_check_branch
    %43 = sbr.rel (0) target = $region37
  $region36: #{multitask_bert_forward.1} parent=0 // pred_region
    _
  $region37: #{multitask_bert_forward.1} parent=0 // pred_fallthru
    _
  // Predicated region
  $region38: #{multitask_bert_forward.1} parent=0 // pred_check
    _
  $region39: #{multitask_bert_forward.1} parent=0 // pred_check_branch
    %45 = sbr.rel (0) target = $region41
  $region40: #{multitask_bert_forward.1} parent=0 // pred_region
    _
  $region41: #{multitask_bert_forward.1} parent=0 // pred_fallthru
    _
  // Predicated region
  $region42: #{multitask_bert_forward.1} parent=0 // pred_check
    _
  $region43: #{multitask_bert_forward.1} parent=0 // pred_check_branch
    %47 = sbr.rel (0) target = $region45
  $region44: #{multitask_bert_forward.1} parent=0 // pred_region
    _
  $region45: #{multitask_bert_forward.1} parent=0 // pred_fallthru
    _
  // Predicated region
  $region46: #{multitask_bert_forward.1} parent=0 // pred_check
    _
  $region47: #{multitask_bert_forward.1} parent=0 // pred_check_branch
    %49 = sbr.rel (0) target = $region49
  $region48: #{multitask_bert_forward.1} parent=0 // pred_region
    _
  $region49: #{multitask_bert_forward.1} parent=0 // pred_fallthru
    _
  // Predicated region
  $region50: #{multitask_bert_forward.1} parent=0 // pred_check
    _
  $region51: #{multitask_bert_forward.1} parent=0 // pred_check_branch
    %51 = sbr.rel (0) target = $region53
  $region52: #{multitask_bert_forward.1} parent=0 // pred_region
    _
  $region53: #{multitask_bert_forward.1} parent=0 // pred_fallthru
    _
  // Predicated region
  $region54: #{multitask_bert_forward.1} parent=0 // pred_check
    _
  $region55: #{multitask_bert_forward.1} parent=0 // pred_check_branch
    %53 = sbr.rel (0) target = $region57
  $region56: #{multitask_bert_forward.1} parent=0 // pred_region
    _
  $region57: #{multitask_bert_forward.1} parent=0 // pred_fallthru
    _
  // Predicated region
  $region58: #{multitask_bert_forward.1} parent=0 // pred_check
    _
  $region59: #{multitask_bert_forward.1} parent=0 // pred_check_branch
    %55 = sbr.rel (0) target = $region61
  $region60: #{multitask_bert_forward.1} parent=0 // pred_region
    _
  $region61: #{multitask_bert_forward.1} parent=0 // pred_fallthru
    _
  // Predicated region
  $region62: #{multitask_bert_forward.1} parent=0 // pred_check
    _
  $region63: #{multitask_bert_forward.1} parent=0 // pred_check_branch
    %57 = sbr.rel (0) target = $region65
  $region64: #{multitask_bert_forward.1} parent=0 // pred_region
    _
  $region65: #{multitask_bert_forward.1} parent=0 // pred_fallthru
    _
  // Predicated region
  $region66: #{multitask_bert_forward.1} parent=0 // pred_check
    _
  $region67: #{multitask_bert_forward.1} parent=0 // pred_check_branch
    %59 = sbr.rel (0) target = $region69
  $region68: #{multitask_bert_forward.1} parent=0 // pred_region
    _
  $region69: #{multitask_bert_forward.1} parent=0 // pred_fallthru
    _
  // Predicated region
  $region70: #{multitask_bert_forward.1} parent=0 // pred_check
    _
  $region71: #{multitask_bert_forward.1} parent=0 // pred_check_branch
    %61 = sbr.rel (0) target = $region73
  $region72: #{multitask_bert_forward.1} parent=0 // pred_region
    _
  $region73: #{multitask_bert_forward.1} parent=0 // pred_fallthru
    _
  // Predicated region
  $region74: #{multitask_bert_forward.1} parent=0 // pred_check
    _
  $region75: #{multitask_bert_forward.1} parent=0 // pred_check_branch
    %63 = sbr.rel (0) target = $region77
  $region76: #{multitask_bert_forward.1} parent=0 // pred_region
    _
  $region77: #{multitask_bert_forward.1} parent=0 // pred_fallthru
    _
  // Predicated region
  $region78: #{multitask_bert_forward.1} parent=0 // pred_check
    _
  $region79: #{multitask_bert_forward.1} parent=0 // pred_check_branch
    %65 = sbr.rel (0) target = $region81
  $region80: #{multitask_bert_forward.1} parent=0 // pred_region
    _
  $region81: #{multitask_bert_forward.1} parent=0 // pred_fallthru
    _
  // Predicated region
  $region82: #{multitask_bert_forward.1} parent=0 // pred_check
    _
  $region83: #{multitask_bert_forward.1} parent=0 // pred_check_branch
    %67 = sbr.rel (0) target = $region85
  $region84: #{multitask_bert_forward.1} parent=0 // pred_region
    _
  $region85: #{multitask_bert_forward.1} parent=0 // pred_fallthru
    _
  %v68 = vld [vmem:[%s0] sm:$0xff]
  %v69 = vld [vmem:[%s0 + $0x8] sm:$0xff]
  %v70 = vld [vmem:[%s3] sm:$0x1]
  %v71 = vld [vmem:[%s4] sm:$0x1]
  %vm72 = vcmask 261120
  %v73 = vsel %vm72, %v68, 0.0
  %74 = vadd.xlane.f32.xlu0 %v73
  %v75 = vpop.xlane.xlu0 %74
  %v76 = vsel %vm72, %v69, 0.0
  %77 = vadd.xlane.f32.xlu0 %v76
  %v78 = vpop.xlane.xlu0 %77
  %v79 = vrcp.pop 32.0
  %v80 = vmul.f32 32.0, %v79
  %v81 = vsub.f32 1.0, %v80
  %v82 = vmul.f32 %v79, %v81
  %v83 = vadd.f32 %v79, %v82
  %vm84 = vweird.f32 %v79
  %v85 = vsel %vm84, %v79, %v83
  %v86 = vmul.f32 %v75, %v85
  %v87 = vmul.f32 %v78, %v85
  %v88 = vsub.f32 %v68, %v86
  %v89 = vsub.f32 %v69, %v87
  %v90 = vmul.f32 %v88, %v88
  %v91 = vmul.f32 %v89, %v89
  %v92 = vsel %vm72, %v90, 0.0
  %93 = vadd.xlane.f32.xlu0 %v92
  %v94 = vpop.xlane.xlu0 %93
  %v95 = vsel %vm72, %v91, 0.0
  %96 = vadd.xlane.f32.xlu0 %v95
  %v97 = vpop.xlane.xlu0 %96
  %v98 = vmul.f32 %v94, %v85
  %v99 = vmul.f32 %v97, %v85
  %v100 = vadd.f32 %v98, 1e-12
  %v101 = vadd.f32 %v99, 1e-12
  %v102 = vrsqrt.pop %v100
  %v103 = vmul.f32 %v102, %v100
  %v104 = vmul.f32 %v103, %v102
  %v105 = vmul.f32 0.5, %v104
  %v106 = vsub.f32 1.5, %v105
  %v107 = vmul.f32 %v102, %v106
  %vm108 = vweird.f32 %v100
  %vm109 = vweird.f32 %v102
  %vm110 = vmor %vm108, %vm109
  %v111 = vsel %vm110, %v102, %v107
  %v112 = vrsqrt.pop %v101
  %v113 = vmul.f32 %v112, %v101
  %v114 = vmul.f32 %v113, %v112
  %v115 = vmul.f32 0.5, %v114
  %v116 = vsub.f32 1.5, %v115
  %v117 = vmul.f32 %v112, %v116
  %vm118 = vweird.f32 %v101
  %vm119 = vweird.f32 %v112
  %vm120 = vmor %vm118, %vm119
  %v121 = vsel %vm120, %v112, %v117
  %v122 = vmul.f32 %v88, %v111
  %v123 = vmul.f32 %v89, %v121
  %v125 = vperm.slane %v70, 0
  %v127 = vmul.f32 %v122, %v125
  %v128 = vmul.f32 %v123, %v125
  %v130 = vperm.slane %v71, 0
  %v132 = vadd.f32 %v127, %v130
  %v133 = vadd.f32 %v128, %v130
  %v134 = vld [vmem:[%s1] sm:$0xff]
  %v135 = vld [vmem:[%s1 + $0x8] sm:$0xff]
  %v136 = vld [vmem:[%s5] sm:$0xff]
  %v137 = vld [vmem:[%s5 + $0x8] sm:$0xff]
  %v138 = vld [vmem:[%s5 + $0x10] sm:$0xff]
  %v139 = vld [vmem:[%s5 + $0x18] sm:$0xff]
  %v140 = vld [vmem:[%s6] sm:$0x1]
  %v142 = vperm.slane %v140, 0
  %v145 = vsel %vm72, %v132, 0
  %v148 = vsel %vm72, %v133, 0
  %150 = vmatpush.msra.mxu0 0.0
  %151 = vmatpush.msra.mxu0 0.0
  %152 = vmatpush.msra.mxu0 0.0
  %153 = vmatpush.msra.mxu0 0.0
  %154 = vmatpush.msra.mxu0 0.0
  %155 = vmatpush.msra.mxu0 0.0
  %156 = vmatpush.msra.mxu0 0.0
  %157 = vmatpush.msra.mxu0 0.0
  %158 = vmatpush.msra.mxu0 0.0
  %159 = vmatpush.msra.mxu0 0.0
  %160 = vmatpush.msra.mxu0 0.0
  %161 = vmatpush.msra.mxu0 0.0
  %162 = vmatpush.msra.mxu0 %v139
  %163 = vmatpush.msra.mxu0 %v138
  %164 = vmatpush.msra.mxu0 %v137
  %165 = vmatpush.msra.mxu0 %v136
  %166 = vmatmul.f32.gmra.mxu0 %v145
  %v167 = vpop.f32.mrf.mxu0
  %v168 = vadd.f32 %v142, %v167
  %169 = vmatmul.f32.gmra.mxu0 %v148
  %v170 = vpop.f32.mrf.mxu0
  %v171 = vadd.f32 %v142, %v170
  %172 = vdwg.mxu0
  %v173 = vld [vmem:[%s7] sm:$0xff]
  %v174 = vld [vmem:[%s7 + $0x8] sm:$0xff]
  %v175 = vld [vmem:[%s7 + $0x10] sm:$0xff]
  %v176 = vld [vmem:[%s7 + $0x18] sm:$0xff]
  %179 = vrot.lane.b32.xlu0 %v168, 96
  %v180 = vpop.permute.xlu0 %179
  %181 = vrot.lane.b32.xlu0 %v171, 96
  %v182 = vpop.permute.xlu0 %181
  %vm183 = vcmask 130048
  %v184 = vsel %vm183, %v168, 0
  %v186 = vsel %vm183, %v171, 0
  %v188 = vsel %vm183, %v180, 0
  %v190 = vsel %vm183, %v182, 0
  %192 = vmatpush.xpose.msra.mxu0 0.0
  %193 = vmatpush.xpose.msra.mxu0 0.0
  %194 = vmatpush.xpose.msra.mxu0 0.0
  %195 = vmatpush.xpose.msra.mxu0 0.0
  %196 = vmatpush.xpose.msra.mxu0 0.0
  %197 = vmatpush.xpose.msra.mxu0 0.0
  %198 = vmatpush.xpose.msra.mxu0 0.0
  %199 = vmatpush.xpose.msra.mxu0 0.0
  %200 = vmatpush.xpose.msra.mxu0 0.0
  %201 = vmatpush.xpose.msra.mxu0 0.0
  %202 = vmatpush.xpose.msra.mxu0 0.0
  %203 = vmatpush.xpose.msra.mxu0 0.0
  %204 = vmatpush.xpose.msra.mxu0 0.0
  %205 = vmatpush.xpose.msra.mxu0 0.0
  %206 = vmatpush.xpose.msra.mxu0 %v190
  %207 = vmatpush.xpose.msra.mxu0 %v188
  %208 = vmatmul.f32.gmra.mxu0 %v184
  %v209 = vpop.f32.mrf.mxu0
  %v210 = vadd.f32 %v134, %v209
  %211 = vmatmul.f32.gmra.mxu0 %v186
  %v212 = vpop.f32.mrf.mxu0
  %v213 = vadd.f32 %v135, %v212
  %214 = vdwg.mxu0
  %v215 = vsel %vm183, %v210, -inf
  %216 = vmax.xlane.f32.xlu0 %v215
  %v217 = vpop.xlane.xlu0 %216
  %v218 = vsel %vm183, %v213, -inf
  %219 = vmax.xlane.f32.xlu0 %v218
  %v220 = vpop.xlane.xlu0 %219
  %v221 = vsub.f32 %v210, %v217
  %v222 = vsub.f32 %v213, %v220
  %v223 = vmul.f32 %v221, 1.442695
  %v224 = vpow.pop %v223
  %v225 = vmul.f32 %v222, 1.442695
  %v226 = vpow.pop %v225
  %v227 = vsel %vm183, %v224, 0.0
  %228 = vadd.xlane.f32.xlu0 %v227
  %v229 = vpop.xlane.xlu0 %228
  %v230 = vsel %vm183, %v226, 0.0
  %231 = vadd.xlane.f32.xlu0 %v230
  %v232 = vpop.xlane.xlu0 %231
  %v233 = vrcp.pop %v229
  %v234 = vrcp.pop %v232
  %v235 = vmul.f32 %v224, %v233
  %v236 = vmul.f32 %v226, %v234
  %237 = vrot.lane.b32.xlu0 %v168, 64
  %v238 = vpop.permute.xlu0 %237
  %239 = vrot.lane.b32.xlu0 %v171, 64
  %v240 = vpop.permute.xlu0 %239
  %v244 = vsel %vm183, %v235, 0
  %v247 = vsel %vm183, %v236, 0
  %249 = vmatpush.msra.mxu0 0.0
  %250 = vmatpush.msra.mxu0 0.0
  %251 = vmatpush.msra.mxu0 0.0
  %252 = vmatpush.msra.mxu0 0.0
  %253 = vmatpush.msra.mxu0 0.0
  %254 = vmatpush.msra.mxu0 0.0
  %255 = vmatpush.msra.mxu0 0.0
  %256 = vmatpush.msra.mxu0 0.0
  %257 = vmatpush.msra.mxu0 0.0
  %258 = vmatpush.msra.mxu0 0.0
  %259 = vmatpush.msra.mxu0 0.0
  %260 = vmatpush.msra.mxu0 0.0
  %261 = vmatpush.msra.mxu0 0.0
  %262 = vmatpush.msra.mxu0 0.0
  %263 = vmatpush.msra.mxu0 %v240
  %264 = vmatpush.msra.mxu0 %v238
  %265 = vmatmul.f32.gmra.mxu0 %v244
  %v266 = vpop.f32.mrf.mxu0
  %v267 = vadd.f32 0.0, %v266
  %268 = vmatmul.f32.gmra.mxu0 %v247
  %v269 = vpop.f32.mrf.mxu0
  %v270 = vadd.f32 0.0, %v269
  %271 = vdwg.mxu0
  %272 = vrot.lane.b32.xlu0 %v168, 112
  %v273 = vpop.permute.xlu0 %272
  %274 = vrot.lane.b32.xlu0 %v171, 112
  %v275 = vpop.permute.xlu0 %274
  %276 = vrot.lane.b32.xlu0 %v168, 80
  %v277 = vpop.permute.xlu0 %276
  %278 = vrot.lane.b32.xlu0 %v171, 80
  %v279 = vpop.permute.xlu0 %278
  %v280 = vsel %vm183, %v273, 0
  %v282 = vsel %vm183, %v275, 0
  %v284 = vsel %vm183, %v277, 0
  %v286 = vsel %vm183, %v279, 0
  %288 = vmatpush.xpose.msra.mxu0 0.0
  %289 = vmatpush.xpose.msra.mxu0 0.0
  %290 = vmatpush.xpose.msra.mxu0 0.0
  %291 = vmatpush.xpose.msra.mxu0 0.0
  %292 = vmatpush.xpose.msra.mxu0 0.0
  %293 = vmatpush.xpose.msra.mxu0 0.0
  %294 = vmatpush.xpose.msra.mxu0 0.0
  %295 = vmatpush.xpose.msra.mxu0 0.0
  %296 = vmatpush.xpose.msra.mxu0 0.0
  %297 = vmatpush.xpose.msra.mxu0 0.0
  %298 = vmatpush.xpose.msra.mxu0 0.0
  %299 = vmatpush.xpose.msra.mxu0 0.0
  %300 = vmatpush.xpose.msra.mxu0 0.0
  %301 = vmatpush.xpose.msra.mxu0 0.0
  %302 = vmatpush.xpose.msra.mxu0 %v286
  %303 = vmatpush.xpose.msra.mxu0 %v284
  %304 = vmatmul.f32.gmra.mxu0 %v280
  %v305 = vpop.f32.mrf.mxu0
  %v306 = vadd.f32 %v134, %v305
  %307 = vmatmul.f32.gmra.mxu0 %v282
  %v308 = vpop.f32.mrf.mxu0
  %v309 = vadd.f32 %v135, %v308
  %310 = vdwg.mxu0
  %v311 = vsel %vm183, %v306, -inf
  %312 = vmax.xlane.f32.xlu0 %v311
  %v313 = vpop.xlane.xlu0 %312
  %v314 = vsel %vm183, %v309, -inf
  %315 = vmax.xlane.f32.xlu0 %v314
  %v316 = vpop.xlane.xlu0 %315
  %v317 = vsub.f32 %v306, %v313
  %v318 = vsub.f32 %v309, %v316
  %v319 = vmul.f32 %v317, 1.442695
  %v320 = vpow.pop %v319
  %v321 = vmul.f32 %v318, 1.442695
  %v322 = vpow.pop %v321
  %v323 = vsel %vm183, %v320, 0.0
  %324 = vadd.xlane.f32.xlu0 %v323
  %v325 = vpop.xlane.xlu0 %324
  %v326 = vsel %vm183, %v322, 0.0
  %327 = vadd.xlane.f32.xlu0 %v326
  %v328 = vpop.xlane.xlu0 %327
  %v329 = vrcp.pop %v325
  %v330 = vrcp.pop %v328
  %v331 = vmul.f32 %v320, %v329
  %v332 = vmul.f32 %v322, %v330
  %333 = vrot.lane.b32.xlu0 %v168, 48
  %v334 = vpop.permute.xlu0 %333
  %335 = vrot.lane.b32.xlu0 %v171, 48
  %v336 = vpop.permute.xlu0 %335
  %v340 = vsel %vm183, %v331, 0
  %v343 = vsel %vm183, %v332, 0
  %345 = vmatpush.msra.mxu0 0.0
  %346 = vmatpush.msra.mxu0 0.0
  %347 = vmatpush.msra.mxu0 0.0
  %348 = vmatpush.msra.mxu0 0.0
  %349 = vmatpush.msra.mxu0 0.0
  %350 = vmatpush.msra.mxu0 0.0
  %351 = vmatpush.msra.mxu0 0.0
  %352 = vmatpush.msra.mxu0 0.0
  %353 = vmatpush.msra.mxu0 0.0
  %354 = vmatpush.msra.mxu0 0.0
  %355 = vmatpush.msra.mxu0 0.0
  %356 = vmatpush.msra.mxu0 0.0
  %357 = vmatpush.msra.mxu0 0.0
  %358 = vmatpush.msra.mxu0 0.0
  %359 = vmatpush.msra.mxu0 %v336
  %360 = vmatpush.msra.mxu0 %v334
  %361 = vmatmul.f32.gmra.mxu0 %v340
  %v362 = vpop.f32.mrf.mxu0
  %v363 = vadd.f32 0.0, %v362
  %364 = vmatmul.f32.gmra.mxu0 %v343
  %v365 = vpop.f32.mrf.mxu0
  %v366 = vadd.f32 0.0, %v365
  %367 = vdwg.mxu0
  %v369 = vsel %vm183, %v363, 0
  %v372 = vsel %vm183, %v366, 0
  %374 = vmatpush.msra.mxu0 0.0
  %375 = vmatpush.msra.mxu0 0.0
  %376 = vmatpush.msra.mxu0 0.0
  %377 = vmatpush.msra.mxu0 0.0
  %378 = vmatpush.msra.mxu0 0.0
  %379 = vmatpush.msra.mxu0 0.0
  %380 = vmatpush.msra.mxu0 0.0
  %381 = vmatpush.msra.mxu0 0.0
  %382 = vmatpush.msra.mxu0 0.0
  %383 = vmatpush.msra.mxu0 0.0
  %384 = vmatpush.msra.mxu0 0.0
  %385 = vmatpush.msra.mxu0 0.0
  %386 = vmatpush.msra.mxu0 0.0
  %387 = vmatpush.msra.mxu0 0.0
  %388 = vmatpush.msra.mxu0 %v176
  %389 = vmatpush.msra.mxu0 %v175
  %390 = vmatmul.f32.gmra.mxu0 %v369
  %v391 = vpop.f32.mrf.mxu0
  %v392 = vadd.f32 0.0, %v391
  %393 = vmatmul.f32.gmra.mxu0 %v372
  %v394 = vpop.f32.mrf.mxu0
  %v395 = vadd.f32 0.0, %v394
  %396 = vdwg.mxu0
  %v398 = vsel %vm183, %v267, 0
  %v401 = vsel %vm183, %v270, 0
  %403 = vmatpush.msra.mxu0 0.0
  %404 = vmatpush.msra.mxu0 0.0
  %405 = vmatpush.msra.mxu0 0.0
  %406 = vmatpush.msra.mxu0 0.0
  %407 = vmatpush.msra.mxu0 0.0
  %408 = vmatpush.msra.mxu0 0.0
  %409 = vmatpush.msra.mxu0 0.0
  %410 = vmatpush.msra.mxu0 0.0
  %411 = vmatpush.msra.mxu0 0.0
  %412 = vmatpush.msra.mxu0 0.0
  %413 = vmatpush.msra.mxu0 0.0
  %414 = vmatpush.msra.mxu0 0.0
  %415 = vmatpush.msra.mxu0 0.0
  %416 = vmatpush.msra.mxu0 0.0
  %417 = vmatpush.msra.mxu0 %v174
  %418 = vmatpush.msra.mxu0 %v173
  %419 = vmatmul.f32.gmra.mxu0 %v398
  %v420 = vpop.f32.mrf.mxu0
  %v421 = vadd.f32 %v392, %v420
  %422 = vmatmul.f32.gmra.mxu0 %v401
  %v423 = vpop.f32.mrf.mxu0
  %v424 = vadd.f32 %v395, %v423
  %425 = vdwg.mxu0
  %v426 = vld [vmem:[%s8] sm:$0x1]
  %v428 = vperm.slane %v426, 0
  %v430 = vadd.f32 %v421, %v428
  %v431 = vadd.f32 %v424, %v428
  %v432 = vadd.f32 %v132, %v430
  %v433 = vadd.f32 %v133, %v431
  %v434 = vld [vmem:[%s9] sm:$0x1]
  %v435 = vld [vmem:[%s10] sm:$0x1]
  %v436 = vsel %vm72, %v432, 0.0
  %437 = vadd.xlane.f32.xlu0 %v436
  %v438 = vpop.xlane.xlu0 %437
  %v439 = vsel %vm72, %v433, 0.0
  %440 = vadd.xlane.f32.xlu0 %v439
  %v441 = vpop.xlane.xlu0 %440
  %v442 = vmul.f32 %v438, %v85
  %v443 = vmul.f32 %v441, %v85
  %v444 = vsub.f32 %v432, %v442
  %v445 = vsub.f32 %v433, %v443
  %v446 = vmul.f32 %v444, %v444
  %v447 = vmul.f32 %v445, %v445
  %v448 = vsel %vm72, %v446, 0.0
  %449 = vadd.xlane.f32.xlu0 %v448
  %v450 = vpop.xlane.xlu0 %449
  %v451 = vsel %vm72, %v447, 0.0
  %452 = vadd.xlane.f32.xlu0 %v451
  %v453 = vpop.xlane.xlu0 %452
  %v454 = vmul.f32 %v450, %v85
  %v455 = vmul.f32 %v453, %v85
  %v456 = vadd.f32 %v454, 1e-12
  %v457 = vadd.f32 %v455, 1e-12
  %v458 = vrsqrt.pop %v456
  %v459 = vmul.f32 %v458, %v456
  %v460 = vmul.f32 %v459, %v458
  %v461 = vmul.f32 0.5, %v460
  %v462 = vsub.f32 1.5, %v461
  %v463 = vmul.f32 %v458, %v462
  %vm464 = vweird.f32 %v456
  %vm465 = vweird.f32 %v458
  %vm466 = vmor %vm464, %vm465
  %v467 = vsel %vm466, %v458, %v463
  %v468 = vrsqrt.pop %v457
  %v469 = vmul.f32 %v468, %v457
  %v470 = vmul.f32 %v469, %v468
  %v471 = vmul.f32 0.5, %v470
  %v472 = vsub.f32 1.5, %v471
  %v473 = vmul.f32 %v468, %v472
  %vm474 = vweird.f32 %v457
  %vm475 = vweird.f32 %v468
  %vm476 = vmor %vm474, %vm475
  %v477 = vsel %vm476, %v468, %v473
  %v478 = vmul.f32 %v444, %v467
  %v479 = vmul.f32 %v445, %v477
  %v481 = vperm.slane %v434, 0
  %v483 = vmul.f32 %v478, %v481
  %v484 = vmul.f32 %v479, %v481
  %v486 = vperm.slane %v435, 0
  %v488 = vadd.f32 %v483, %v486
  %v489 = vadd.f32 %v484, %v486
  %v490 = vld [vmem:[%s11] sm:$0xff]
  %v491 = vld [vmem:[%s11 + $0x8] sm:$0xff]
  %v492 = vld [vmem:[%s11 + $0x10] sm:$0xff]
  %v493 = vld [vmem:[%s11 + $0x18] sm:$0xff]
  %v494 = vld [vmem:[%s12] sm:$0x1]
  %v496 = vperm.slane %v494, 0
  %v499 = vsel %vm72, %v488, 0
  %v502 = vsel %vm72, %v489, 0
  %504 = vmatpush.msra.mxu0 0.0
  %505 = vmatpush.msra.mxu0 0.0
  %506 = vmatpush.msra.mxu0 0.0
  %507 = vmatpush.msra.mxu0 0.0
  %508 = vmatpush.msra.mxu0 0.0
  %509 = vmatpush.msra.mxu0 0.0
  %510 = vmatpush.msra.mxu0 0.0
  %511 = vmatpush.msra.mxu0 0.0
  %512 = vmatpush.msra.mxu0 0.0
  %513 = vmatpush.msra.mxu0 0.0
  %514 = vmatpush.msra.mxu0 0.0
  %515 = vmatpush.msra.mxu0 0.0
  %516 = vmatpush.msra.mxu0 %v493
  %517 = vmatpush.msra.mxu0 %v492
  %518 = vmatpush.msra.mxu0 %v491
  %519 = vmatpush.msra.mxu0 %v490
  %520 = vmatmul.f32.gmra.mxu0 %v499
  %v521 = vpop.f32.mrf.mxu0
  %v522 = vadd.f32 %v496, %v521
  %523 = vmatmul.f32.gmra.mxu0 %v502
  %v524 = vpop.f32.mrf.mxu0
  %v525 = vadd.f32 %v496, %v524
  %526 = vdwg.mxu0
  %v527 = vmul.f32 %v522, 0.5
  %v528 = vmul.f32 %v525, 0.5
  %v529 = vmul.f32 %v522, 0.044715
  %v530 = vmul.f32 %v525, 0.044715
  %v531 = vmul.f32 %v529, %v522
  %v532 = vmul.f32 %v530, %v525
  %v533 = vmul.f32 %v531, %v522
  %v534 = vmul.f32 %v532, %v525
  %v535 = vadd.f32 %v522, %v533
  %v536 = vadd.f32 %v525, %v534
  %v537 = vmul.f32 %v535, 0.7978846
  %v538 = vmul.f32 %v536, 0.7978846
  %v539 = vtanh.pop %v537
  %v540 = vtanh.pop %v538
  %v541 = vadd.f32 %v539, 1.0
  %v542 = vadd.f32 %v540, 1.0
  %v543 = vmul.f32 %v527, %v541
  %v544 = vmul.f32 %v528, %v542
  %v545 = vld [vmem:[%s13] sm:$0xff]
  %v546 = vld [vmem:[%s13 + $0x8] sm:$0xff]
  %v547 = vld [vmem:[%s13 + $0x10] sm:$0xff]
  %v548 = vld [vmem:[%s13 + $0x18] sm:$0xff]
  %v549 = vld [vmem:[%s13 + $0x20] sm:$0xff]
  %v550 = vld [vmem:[%s13 + $0x28] sm:$0xff]
  %v551 = vld [vmem:[%s13 + $0x30] sm:$0xff]
  %v552 = vld [vmem:[%s13 + $0x38] sm:$0xff]
  %v553 = vld [vmem:[%s14] sm:$0x1]
  %v555 = vperm.slane %v553, 0
  %vm557 = vcmask 523264
  %v559 = vsel %vm557, %v543, 0
  %v562 = vsel %vm557, %v544, 0
  %564 = vmatpush.msra.mxu0 0.0
  %565 = vmatpush.msra.mxu0 0.0
  %566 = vmatpush.msra.mxu0 0.0
  %567 = vmatpush.msra.mxu0 0.0
  %568 = vmatpush.msra.mxu0 0.0
  %569 = vmatpush.msra.mxu0 0.0
  %570 = vmatpush.msra.mxu0 0.0
  %571 = vmatpush.msra.mxu0 0.0
  %572 = vmatpush.msra.mxu0 %v552
  %573 = vmatpush.msra.mxu0 %v551
  %574 = vmatpush.msra.mxu0 %v550
  %575 = vmatpush.msra.mxu0 %v549
  %576 = vmatpush.msra.mxu0 %v548
  %577 = vmatpush.msra.mxu0 %v547
  %578 = vmatpush.msra.mxu0 %v546
  %579 = vmatpush.msra.mxu0 %v545
  %580 = vmatmul.f32.gmra.mxu0 %v559
  %v581 = vpop.f32.mrf.mxu0
  %v582 = vadd.f32 %v555, %v581
  %583 = vmatmul.f32.gmra.mxu0 %v562
  %v584 = vpop.f32.mrf.mxu0
  %v585 = vadd.f32 %v555, %v584
  %586 = vdwg.mxu0
  %v587 = vadd.f32 %v488, %v582
  %v588 = vadd.f32 %v489, %v585
  %v589 = vld [vmem:[%s15] sm:$0x1]
  %v590 = vld [vmem:[%s16] sm:$0x1]
  %v591 = vsel %vm72, %v587, 0.0
  %592 = vadd.xlane.f32.xlu0 %v591
  %v593 = vpop.xlane.xlu0 %592
  %v594 = vsel %vm72, %v588, 0.0
  %595 = vadd.xlane.f32.xlu0 %v594
  %v596 = vpop.xlane.xlu0 %595
  %v597 = vmul.f32 %v593, %v85
  %v598 = vmul.f32 %v596, %v85
  %v599 = vsub.f32 %v587, %v597
  %v600 = vsub.f32 %v588, %v598
  %v601 = vmul.f32 %v599, %v599
  %v602 = vmul.f32 %v600, %v600
  %v603 = vsel %vm72, %v601, 0.0
  %604 = vadd.xlane.f32.xlu0 %v603
  %v605 = vpop.xlane.xlu0 %604
  %v606 = vsel %vm72, %v602, 0.0
  %607 = vadd.xlane.f32.xlu0 %v606
  %v608 = vpop.xlane.xlu0 %607
  %v609 = vmul.f32 %v605, %v85
  %v610 = vmul.f32 %v608, %v85
  %v611 = vadd.f32 %v609, 1e-12
  %v612 = vadd.f32 %v610, 1e-12
  %v613 = vrsqrt.pop %v611
  %v614 = vmul.f32 %v613, %v611
  %v615 = vmul.f32 %v614, %v613
  %v616 = vmul.f32 0.5, %v615
  %v617 = vsub.f32 1.5, %v616
  %v618 = vmul.f32 %v613, %v617
  %vm619 = vweird.f32 %v611
  %vm620 = vweird.f32 %v613
  %vm621 = vmor %vm619, %vm620
  %v622 = vsel %vm621, %v613, %v618
  %v623 = vrsqrt.pop %v612
  %v624 = vmul.f32 %v623, %v612
  %v625 = vmul.f32 %v624, %v623
  %v626 = vmul.f32 0.5, %v625
  %v627 = vsub.f32 1.5, %v626
  %v628 = vmul.f32 %v623, %v627
  %vm629 = vweird.f32 %v612
  %vm630 = vweird.f32 %v623
  %vm631 = vmor %vm629, %vm630
  %v632 = vsel %vm631, %v623, %v628
  %v633 = vmul.f32 %v599, %v622
  %v634 = vmul.f32 %v600, %v632
  %v636 = vperm.slane %v589, 0
  %v638 = vmul.f32 %v633, %v636
  %v639 = vmul.f32 %v634, %v636
  %v641 = vperm.slane %v590, 0
  %v643 = vadd.f32 %v638, %v641
  %v644 = vadd.f32 %v639, %v641
  %s645 = scalar_lea.vmem %s5, 32
  %v646 = vld [vmem:[%s645] sm:$0xff]
  %v647 = vld [vmem:[%s645 + $0x8] sm:$0xff]
  %v648 = vld [vmem:[%s645 + $0x10] sm:$0xff]
  %v649 = vld [vmem:[%s645 + $0x18] sm:$0xff]
  %s650 = scalar_lea.vmem %s6, 1
  %v651 = vld [vmem:[%s650] sm:$0x1]
  %v653 = vperm.slane %v651, 0
  %v656 = vsel %vm72, %v643, 0
  %v659 = vsel %vm72, %v644, 0
  %661 = vmatpush.msra.mxu0 0.0
  %662 = vmatpush.msra.mxu0 0.0
  %663 = vmatpush.msra.mxu0 0.0
  %664 = vmatpush.msra.mxu0 0.0
  %665 = vmatpush.msra.mxu0 0.0
  %666 = vmatpush.msra.mxu0 0.0
  %667 = vmatpush.msra.mxu0 0.0
  %668 = vmatpush.msra.mxu0 0.0
  %669 = vmatpush.msra.mxu0 0.0
  %670 = vmatpush.msra.mxu0 0.0
  %671 = vmatpush.msra.mxu0 0.0
  %672 = vmatpush.msra.mxu0 0.0
  %673 = vmatpush.msra.mxu0 %v649
  %674 = vmatpush.msra.mxu0 %v648
  %675 = vmatpush.msra.mxu0 %v647
  %676 = vmatpush.msra.mxu0 %v646
  %677 = vmatmul.f32.gmra.mxu0 %v656
  %v678 = vpop.f32.mrf.mxu0
  %v679 = vadd.f32 %v653, %v678
  %680 = vmatmul.f32.gmra.mxu0 %v659
  %v681 = vpop.f32.mrf.mxu0
  %v682 = vadd.f32 %v653, %v681
  %683 = vdwg.mxu0
  %s684 = scalar_lea.vmem %s7, 32
  %v685 = vld [vmem:[%s684] sm:$0xff]
  %v686 = vld [vmem:[%s684 + $0x8] sm:$0xff]
  %v687 = vld [vmem:[%s684 + $0x10] sm:$0xff]
  %v688 = vld [vmem:[%s684 + $0x18] sm:$0xff]
  %691 = vrot.lane.b32.xlu0 %v679, 96
  %v692 = vpop.permute.xlu0 %691
  %693 = vrot.lane.b32.xlu0 %v682, 96
  %v694 = vpop.permute.xlu0 %693
  %v695 = vsel %vm183, %v679, 0
  %v697 = vsel %vm183, %v682, 0
  %v699 = vsel %vm183, %v692, 0
  %v701 = vsel %vm183, %v694, 0
  %703 = vmatpush.xpose.msra.mxu0 0.0
  %704 = vmatpush.xpose.msra.mxu0 0.0
  %705 = vmatpush.xpose.msra.mxu0 0.0
  %706 = vmatpush.xpose.msra.mxu0 0.0
  %707 = vmatpush.xpose.msra.mxu0 0.0
  %708 = vmatpush.xpose.msra.mxu0 0.0
  %709 = vmatpush.xpose.msra.mxu0 0.0
  %710 = vmatpush.xpose.msra.mxu0 0.0
  %711 = vmatpush.xpose.msra.mxu0 0.0
  %712 = vmatpush.xpose.msra.mxu0 0.0
  %713 = vmatpush.xpose.msra.mxu0 0.0
  %714 = vmatpush.xpose.msra.mxu0 0.0
  %715 = vmatpush.xpose.msra.mxu0 0.0
  %716 = vmatpush.xpose.msra.mxu0 0.0
  %717 = vmatpush.xpose.msra.mxu0 %v701
  %718 = vmatpush.xpose.msra.mxu0 %v699
  %719 = vmatmul.f32.gmra.mxu0 %v695
  %v720 = vpop.f32.mrf.mxu0
  %v721 = vadd.f32 %v134, %v720
  %722 = vmatmul.f32.gmra.mxu0 %v697
  %v723 = vpop.f32.mrf.mxu0
  %v724 = vadd.f32 %v135, %v723
  %725 = vdwg.mxu0
  %v726 = vsel %vm183, %v721, -inf
  %727 = vmax.xlane.f32.xlu0 %v726
  %v728 = vpop.xlane.xlu0 %727
  %v729 = vsel %vm183, %v724, -inf
  %730 = vmax.xlane.f32.xlu0 %v729
  %v731 = vpop.xlane.xlu0 %730
  %v732 = vsub.f32 %v721, %v728
  %v733 = vsub.f32 %v724, %v731
  %v734 = vmul.f32 %v732, 1.442695
  %v735 = vpow.pop %v734
  %v736 = vmul.f32 %v733, 1.442695
  %v737 = vpow.pop %v736
  %v738 = vsel %vm183, %v735, 0.0
  %739 = vadd.xlane.f32.xlu0 %v738
  %v740 = vpop.xlane.xlu0 %739
  %v741 = vsel %vm183, %v737, 0.0
  %742 = vadd.xlane.f32.xlu0 %v741
  %v743 = vpop.xlane.xlu0 %742
  %v744 = vrcp.pop %v740
  %v745 = vrcp.pop %v743
  %v746 = vmul.f32 %v735, %v744
  %v747 = vmul.f32 %v737, %v745
  %748 = vrot.lane.b32.xlu0 %v679, 64
  %v749 = vpop.permute.xlu0 %748
  %750 = vrot.lane.b32.xlu0 %v682, 64
  %v751 = vpop.permute.xlu0 %750
  %v755 = vsel %vm183, %v746, 0
  %v758 = vsel %vm183, %v747, 0
  %760 = vmatpush.msra.mxu0 0.0
  %761 = vmatpush.msra.mxu0 0.0
  %762 = vmatpush.msra.mxu0 0.0
  %763 = vmatpush.msra.mxu0 0.0
  %764 = vmatpush.msra.mxu0 0.0
  %765 = vmatpush.msra.mxu0 0.0
  %766 = vmatpush.msra.mxu0 0.0
  %767 = vmatpush.msra.mxu0 0.0
  %768 = vmatpush.msra.mxu0 0.0
  %769 = vmatpush.msra.mxu0 0.0
  %770 = vmatpush.msra.mxu0 0.0
  %771 = vmatpush.msra.mxu0 0.0
  %772 = vmatpush.msra.mxu0 0.0
  %773 = vmatpush.msra.mxu0 0.0
  %774 = vmatpush.msra.mxu0 %v751
  %775 = vmatpush.msra.mxu0 %v749
  %776 = vmatmul.f32.gmra.mxu0 %v755
  %v777 = vpop.f32.mrf.mxu0
  %v778 = vadd.f32 0.0, %v777
  %779 = vmatmul.f32.gmra.mxu0 %v758
  %v780 = vpop.f32.mrf.mxu0
  %v781 = vadd.f32 0.0, %v780
  %782 = vdwg.mxu0
  %783 = vrot.lane.b32.xlu0 %v679, 112
  %v784 = vpop.permute.xlu0 %783
  %785 = vrot.lane.b32.xlu0 %v682, 112
  %v786 = vpop.permute.xlu0 %785
  %787 = vrot.lane.b32.xlu0 %v679, 80
  %v788 = vpop.permute.xlu0 %787
  %789 = vrot.lane.b32.xlu0 %v682, 80
  %v790 = vpop.permute.xlu0 %789
  %v791 = vsel %vm183, %v784, 0
  %v793 = vsel %vm183, %v786, 0
  %v795 = vsel %vm183, %v788, 0
  %v797 = vsel %vm183, %v790, 0
  %799 = vmatpush.xpose.msra.mxu0 0.0
  %800 = vmatpush.xpose.msra.mxu0 0.0
  %801 = vmatpush.xpose.msra.mxu0 0.0
  %802 = vmatpush.xpose.msra.mxu0 0.0
  %803 = vmatpush.xpose.msra.mxu0 0.0
  %804 = vmatpush.xpose.msra.mxu0 0.0
  %805 = vmatpush.xpose.msra.mxu0 0.0
  %806 = vmatpush.xpose.msra.mxu0 0.0
  %807 = vmatpush.xpose.msra.mxu0 0.0
  %808 = vmatpush.xpose.msra.mxu0 0.0
  %809 = vmatpush.xpose.msra.mxu0 0.0
  %810 = vmatpush.xpose.msra.mxu0 0.0
  %811 = vmatpush.xpose.msra.mxu0 0.0
  %812 = vmatpush.xpose.msra.mxu0 0.0
  %813 = vmatpush.xpose.msra.mxu0 %v797
  %814 = vmatpush.xpose.msra.mxu0 %v795
  %815 = vmatmul.f32.gmra.mxu0 %v791
  %v816 = vpop.f32.mrf.mxu0
  %v817 = vadd.f32 %v134, %v816
  %818 = vmatmul.f32.gmra.mxu0 %v793
  %v819 = vpop.f32.mrf.mxu0
  %v820 = vadd.f32 %v135, %v819
  %821 = vdwg.mxu0
  %v822 = vsel %vm183, %v817, -inf
  %823 = vmax.xlane.f32.xlu0 %v822
  %v824 = vpop.xlane.xlu0 %823
  %v825 = vsel %vm183, %v820, -inf
  %826 = vmax.xlane.f32.xlu0 %v825
  %v827 = vpop.xlane.xlu0 %826
  %v828 = vsub.f32 %v817, %v824
  %v829 = vsub.f32 %v820, %v827
  %v830 = vmul.f32 %v828, 1.442695
  %v831 = vpow.pop %v830
  %v832 = vmul.f32 %v829, 1.442695
  %v833 = vpow.pop %v832
  %v834 = vsel %vm183, %v831, 0.0
  %835 = vadd.xlane.f32.xlu0 %v834
  %v836 = vpop.xlane.xlu0 %835
  %v837 = vsel %vm183, %v833, 0.0
  %838 = vadd.xlane.f32.xlu0 %v837
  %v839 = vpop.xlane.xlu0 %838
  %v840 = vrcp.pop %v836
  %v841 = vrcp.pop %v839
  %v842 = vmul.f32 %v831, %v840
  %v843 = vmul.f32 %v833, %v841
  %844 = vrot.lane.b32.xlu0 %v679, 48
  %v845 = vpop.permute.xlu0 %844
  %846 = vrot.lane.b32.xlu0 %v682, 48
  %v847 = vpop.permute.xlu0 %846
  %v851 = vsel %vm183, %v842, 0
  %v854 = vsel %vm183, %v843, 0
  %856 = vmatpush.msra.mxu0 0.0
  %857 = vmatpush.msra.mxu0 0.0
  %858 = vmatpush.msra.mxu0 0.0
  %859 = vmatpush.msra.mxu0 0.0
  %860 = vmatpush.msra.mxu0 0.0
  %861 = vmatpush.msra.mxu0 0.0
  %862 = vmatpush.msra.mxu0 0.0
  %863 = vmatpush.msra.mxu0 0.0
  %864 = vmatpush.msra.mxu0 0.0
  %865 = vmatpush.msra.mxu0 0.0
  %866 = vmatpush.msra.mxu0 0.0
  %867 = vmatpush.msra.mxu0 0.0
  %868 = vmatpush.msra.mxu0 0.0
  %869 = vmatpush.msra.mxu0 0.0
  %870 = vmatpush.msra.mxu0 %v847
  %871 = vmatpush.msra.mxu0 %v845
  %872 = vmatmul.f32.gmra.mxu0 %v851
  %v873 = vpop.f32.mrf.mxu0
  %v874 = vadd.f32 0.0, %v873
  %875 = vmatmul.f32.gmra.mxu0 %v854
  %v876 = vpop.f32.mrf.mxu0
  %v877 = vadd.f32 0.0, %v876
  %878 = vdwg.mxu0
  %v880 = vsel %vm183, %v874, 0
  %v883 = vsel %vm183, %v877, 0
  %885 = vmatpush.msra.mxu0 0.0
  %886 = vmatpush.msra.mxu0 0.0
  %887 = vmatpush.msra.mxu0 0.0
  %888 = vmatpush.msra.mxu0 0.0
  %889 = vmatpush.msra.mxu0 0.0
  %890 = vmatpush.msra.mxu0 0.0
  %891 = vmatpush.msra.mxu0 0.0
  %892 = vmatpush.msra.mxu0 0.0
  %893 = vmatpush.msra.mxu0 0.0
  %894 = vmatpush.msra.mxu0 0.0
  %895 = vmatpush.msra.mxu0 0.0
  %896 = vmatpush.msra.mxu0 0.0
  %897 = vmatpush.msra.mxu0 0.0
  %898 = vmatpush.msra.mxu0 0.0
  %899 = vmatpush.msra.mxu0 %v688
  %900 = vmatpush.msra.mxu0 %v687
  %901 = vmatmul.f32.gmra.mxu0 %v880
  %v902 = vpop.f32.mrf.mxu0
  %v903 = vadd.f32 0.0, %v902
  %904 = vmatmul.f32.gmra.mxu0 %v883
  %v905 = vpop.f32.mrf.mxu0
  %v906 = vadd.f32 0.0, %v905
  %907 = vdwg.mxu0
  %v909 = vsel %vm183, %v778, 0
  %v912 = vsel %vm183, %v781, 0
  %914 = vmatpush.msra.mxu0 0.0
  %915 = vmatpush.msra.mxu0 0.0
  %916 = vmatpush.msra.mxu0 0.0
  %917 = vmatpush.msra.mxu0 0.0
  %918 = vmatpush.msra.mxu0 0.0
  %919 = vmatpush.msra.mxu0 0.0
  %920 = vmatpush.msra.mxu0 0.0
  %921 = vmatpush.msra.mxu0 0.0
  %922 = vmatpush.msra.mxu0 0.0
  %923 = vmatpush.msra.mxu0 0.0
  %924 = vmatpush.msra.mxu0 0.0
  %925 = vmatpush.msra.mxu0 0.0
  %926 = vmatpush.msra.mxu0 0.0
  %927 = vmatpush.msra.mxu0 0.0
  %928 = vmatpush.msra.mxu0 %v686
  %929 = vmatpush.msra.mxu0 %v685
  %930 = vmatmul.f32.gmra.mxu0 %v909
  %v931 = vpop.f32.mrf.mxu0
  %v932 = vadd.f32 %v903, %v931
  %933 = vmatmul.f32.gmra.mxu0 %v912
  %v934 = vpop.f32.mrf.mxu0
  %v935 = vadd.f32 %v906, %v934
  %936 = vdwg.mxu0
  %s937 = scalar_lea.vmem %s8, 1
  %v938 = vld [vmem:[%s937] sm:$0x1]
  %v940 = vperm.slane %v938, 0
  %v942 = vadd.f32 %v932, %v940
  %v943 = vadd.f32 %v935, %v940
  %v944 = vadd.f32 %v643, %v942
  %v945 = vadd.f32 %v644, %v943
  %s946 = scalar_lea.vmem %s9, 1
  %v947 = vld [vmem:[%s946] sm:$0x1]
  %s948 = scalar_lea.vmem %s10, 1
  %v949 = vld [vmem:[%s948] sm:$0x1]
  %v950 = vsel %vm72, %v944, 0.0
  %951 = vadd.xlane.f32.xlu0 %v950
  %v952 = vpop.xlane.xlu0 %951
  %v953 = vsel %vm72, %v945, 0.0
  %954 = vadd.xlane.f32.xlu0 %v953
  %v955 = vpop.xlane.xlu0 %954
  %v956 = vmul.f32 %v952, %v85
  %v957 = vmul.f32 %v955, %v85
  %v958 = vsub.f32 %v944, %v956
  %v959 = vsub.f32 %v945, %v957
  %v960 = vmul.f32 %v958, %v958
  %v961 = vmul.f32 %v959, %v959
  %v962 = vsel %vm72, %v960, 0.0
  %963 = vadd.xlane.f32.xlu0 %v962
  %v964 = vpop.xlane.xlu0 %963
  %v965 = vsel %vm72, %v961, 0.0
  %966 = vadd.xlane.f32.xlu0 %v965
  %v967 = vpop.xlane.xlu0 %966
  %v968 = vmul.f32 %v964, %v85
  %v969 = vmul.f32 %v967, %v85
  %v970 = vadd.f32 %v968, 1e-12
  %v971 = vadd.f32 %v969, 1e-12
  %v972 = vrsqrt.pop %v970
  %v973 = vmul.f32 %v972, %v970
  %v974 = vmul.f32 %v973, %v972
  %v975 = vmul.f32 0.5, %v974
  %v976 = vsub.f32 1.5, %v975
  %v977 = vmul.f32 %v972, %v976
  %vm978 = vweird.f32 %v970
  %vm979 = vweird.f32 %v972
  %vm980 = vmor %vm978, %vm979
  %v981 = vsel %vm980, %v972, %v977
  %v982 = vrsqrt.pop %v971
  %v983 = vmul.f32 %v982, %v971
  %v984 = vmul.f32 %v983, %v982
  %v985 = vmul.f32 0.5, %v984
  %v986 = vsub.f32 1.5, %v985
  %v987 = vmul.f32 %v982, %v986
  %vm988 = vweird.f32 %v971
  %vm989 = vweird.f32 %v982
  %vm990 = vmor %vm988, %vm989
  %v991 = vsel %vm990, %v982, %v987
  %v992 = vmul.f32 %v958, %v981
  %v993 = vmul.f32 %v959, %v991
  %v995 = vperm.slane %v947, 0
  %v997 = vmul.f32 %v992, %v995
  %v998 = vmul.f32 %v993, %v995
  %v1000 = vperm.slane %v949, 0
  %v1002 = vadd.f32 %v997, %v1000
  %v1003 = vadd.f32 %v998, %v1000
  %s1004 = scalar_lea.vmem %s11, 32
  %v1005 = vld [vmem:[%s1004] sm:$0xff]
  %v1006 = vld [vmem:[%s1004 + $0x8] sm:$0xff]
  %v1007 = vld [vmem:[%s1004 + $0x10] sm:$0xff]
  %v1008 = vld [vmem:[%s1004 + $0x18] sm:$0xff]
  %s1009 = scalar_lea.vmem %s12, 1
  %v1010 = vld [vmem:[%s1009] sm:$0x1]
  %v1012 = vperm.slane %v1010, 0
  %v1015 = vsel %vm72, %v1002, 0
  %v1018 = vsel %vm72, %v1003, 0
  %1020 = vmatpush.msra.mxu0 0.0
  %1021 = vmatpush.msra.mxu0 0.0
  %1022 = vmatpush.msra.mxu0 0.0
  %1023 = vmatpush.msra.mxu0 0.0
  %1024 = vmatpush.msra.mxu0 0.0
  %1025 = vmatpush.msra.mxu0 0.0
  %1026 = vmatpush.msra.mxu0 0.0
  %1027 = vmatpush.msra.mxu0 0.0
  %1028 = vmatpush.msra.mxu0 0.0
  %1029 = vmatpush.msra.mxu0 0.0
  %1030 = vmatpush.msra.mxu0 0.0
  %1031 = vmatpush.msra.mxu0 0.0
  %1032 = vmatpush.msra.mxu0 %v1008
  %1033 = vmatpush.msra.mxu0 %v1007
  %1034 = vmatpush.msra.mxu0 %v1006
  %1035 = vmatpush.msra.mxu0 %v1005
  %1036 = vmatmul.f32.gmra.mxu0 %v1015
  %v1037 = vpop.f32.mrf.mxu0
  %v1038 = vadd.f32 %v1012, %v1037
  %1039 = vmatmul.f32.gmra.mxu0 %v1018
  %v1040 = vpop.f32.mrf.mxu0
  %v1041 = vadd.f32 %v1012, %v1040
  %1042 = vdwg.mxu0
  %v1043 = vmul.f32 %v1038, 0.5
  %v1044 = vmul.f32 %v1041, 0.5
  %v1045 = vmul.f32 %v1038, 0.044715
  %v1046 = vmul.f32 %v1041, 0.044715
  %v1047 = vmul.f32 %v1045, %v1038
  %v1048 = vmul.f32 %v1046, %v1041
  %v1049 = vmul.f32 %v1047, %v1038
  %v1050 = vmul.f32 %v1048, %v1041
  %v1051 = vadd.f32 %v1038, %v1049
  %v1052 = vadd.f32 %v1041, %v1050
  %v1053 = vmul.f32 %v1051, 0.7978846
  %v1054 = vmul.f32 %v1052, 0.7978846
  %v1055 = vtanh.pop %v1053
  %v1056 = vtanh.pop %v1054
  %v1057 = vadd.f32 %v1055, 1.0
  %v1058 = vadd.f32 %v1056, 1.0
  %v1059 = vmul.f32 %v1043, %v1057
  %v1060 = vmul.f32 %v1044, %v1058
  %s1061 = scalar_lea.vmem %s13, 64
  %v1062 = vld [vmem:[%s1061] sm:$0xff]
  %v1063 = vld [vmem:[%s1061 + $0x8] sm:$0xff]
  %v1064 = vld [vmem:[%s1061 + $0x10] sm:$0xff]
  %v1065 = vld [vmem:[%s1061 + $0x18] sm:$0xff]
  %v1066 = vld [vmem:[%s1061 + $0x20] sm:$0xff]
  %v1067 = vld [vmem:[%s1061 + $0x28] sm:$0xff]
  %v1068 = vld [vmem:[%s1061 + $0x30] sm:$0xff]
  %v1069 = vld [vmem:[%s1061 + $0x38] sm:$0xff]
  %s1070 = scalar_lea.vmem %s14, 1
  %v1071 = vld [vmem:[%s1070] sm:$0x1]
  %v1073 = vperm.slane %v1071, 0
  %v1076 = vsel %vm557, %v1059, 0
  %v1079 = vsel %vm557, %v1060, 0
  %1081 = vmatpush.msra.mxu0 0.0
  %1082 = vmatpush.msra.mxu0 0.0
  %1083 = vmatpush.msra.mxu0 0.0
  %1084 = vmatpush.msra.mxu0 0.0
  %1085 = vmatpush.msra.mxu0 0.0
  %1086 = vmatpush.msra.mxu0 0.0
  %1087 = vmatpush.msra.mxu0 0.0
  %1088 = vmatpush.msra.mxu0 0.0
  %1089 = vmatpush.msra.mxu0 %v1069
  %1090 = vmatpush.msra.mxu0 %v1068
  %1091 = vmatpush.msra.mxu0 %v1067
  %1092 = vmatpush.msra.mxu0 %v1066
  %1093 = vmatpush.msra.mxu0 %v1065
  %1094 = vmatpush.msra.mxu0 %v1064
  %1095 = vmatpush.msra.mxu0 %v1063
  %1096 = vmatpush.msra.mxu0 %v1062
  %1097 = vmatmul.f32.gmra.mxu0 %v1076
  %v1098 = vpop.f32.mrf.mxu0
  %v1099 = vadd.f32 %v1073, %v1098
  %1100 = vmatmul.f32.gmra.mxu0 %v1079
  %v1101 = vpop.f32.mrf.mxu0
  %v1102 = vadd.f32 %v1073, %v1101
  %1103 = vdwg.mxu0
  %v1104 = vadd.f32 %v1002, %v1099
  %v1105 = vadd.f32 %v1003, %v1102
  %s1106 = scalar_lea.vmem %s15, 1
  %v1107 = vld [vmem:[%s1106] sm:$0x1]
  %s1108 = scalar_lea.vmem %s16, 1
  %v1109 = vld [vmem:[%s1108] sm:$0x1]
  %v1110 = vsel %vm72, %v1104, 0.0
  %1111 = vadd.xlane.f32.xlu0 %v1110
  %v1112 = vpop.xlane.xlu0 %1111
  %v1113 = vsel %vm72, %v1105, 0.0
  %1114 = vadd.xlane.f32.xlu0 %v1113
  %v1115 = vpop.xlane.xlu0 %1114
  %v1116 = vmul.f32 %v1112, %v85
  %v1117 = vmul.f32 %v1115, %v85
  %v1118 = vsub.f32 %v1104, %v1116
  %v1119 = vsub.f32 %v1105, %v1117
  %v1120 = vmul.f32 %v1118, %v1118
  %v1121 = vmul.f32 %v1119, %v1119
  %v1122 = vsel %vm72, %v1120, 0.0
  %1123 = vadd.xlane.f32.xlu0 %v1122
  %v1124 = vpop.xlane.xlu0 %1123
  %v1125 = vsel %vm72, %v1121, 0.0
  %1126 = vadd.xlane.f32.xlu0 %v1125
  %v1127 = vpop.xlane.xlu0 %1126
  %v1128 = vmul.f32 %v1124, %v85
  %v1129 = vmul.f32 %v1127, %v85
  %v1130 = vadd.f32 %v1128, 1e-12
  %v1131 = vadd.f32 %v1129, 1e-12
  %v1132 = vrsqrt.pop %v1130
  %v1133 = vmul.f32 %v1132, %v1130
  %v1134 = vmul.f32 %v1133, %v1132
  %v1135 = vmul.f32 0.5, %v1134
  %v1136 = vsub.f32 1.5, %v1135
  %v1137 = vmul.f32 %v1132, %v1136
  %vm1138 = vweird.f32 %v1130
  %vm1139 = vweird.f32 %v1132
  %vm1140 = vmor %vm1138, %vm1139
  %v1141 = vsel %vm1140, %v1132, %v1137
  %v1142 = vrsqrt.pop %v1131
  %v1143 = vmul.f32 %v1142, %v1131
  %v1144 = vmul.f32 %v1143, %v1142
  %v1145 = vmul.f32 0.5, %v1144
  %v1146 = vsub.f32 1.5, %v1145
  %v1147 = vmul.f32 %v1142, %v1146
  %vm1148 = vweird.f32 %v1131
  %vm1149 = vweird.f32 %v1142
  %vm1150 = vmor %vm1148, %vm1149
  %v1151 = vsel %vm1150, %v1142, %v1147
  %v1152 = vmul.f32 %v1118, %v1141
  %v1153 = vmul.f32 %v1119, %v1151
  %v1155 = vperm.slane %v1107, 0
  %v1157 = vmul.f32 %v1152, %v1155
  %v1158 = vmul.f32 %v1153, %v1155
  %v1160 = vperm.slane %v1109, 0
  %v1162 = vadd.f32 %v1157, %v1160
  %v1163 = vadd.f32 %v1158, %v1160
  %v1164 = vld [vmem:[%s2] sm:$0x3]
  %v1166 = vsel %vm183, %v1164, 0
  %1168 = vmatpush.msra.mxu0 0.0
  %1169 = vmatpush.msra.mxu0 0.0
  %1170 = vmatpush.msra.mxu0 0.0
  %1171 = vmatpush.msra.mxu0 0.0
  %1172 = vmatpush.msra.mxu0 0.0
  %1173 = vmatpush.msra.mxu0 0.0
  %1174 = vmatpush.msra.mxu0 0.0
  %1175 = vmatpush.msra.mxu0 0.0
  %1176 = vmatpush.msra.mxu0 0.0
  %1177 = vmatpush.msra.mxu0 0.0
  %1178 = vmatpush.msra.mxu0 0.0
  %1179 = vmatpush.msra.mxu0 0.0
  %1180 = vmatpush.msra.mxu0 0.0
  %1181 = vmatpush.msra.mxu0 0.0
  %1182 = vmatpush.msra.mxu0 %v1163
  %1183 = vmatpush.msra.mxu0 %v1162
  %1184 = vmatmul.f32.gmra.mxu0 %v1166
  %v1185 = vpop.f32.mrf.mxu0
  %v1186 = vadd.f32 0.0, %v1185
  %1187 = vdwg.mxu0
  %v1188 = vld [vmem:[%s17] sm:$0xff]
  %v1189 = vld [vmem:[%s17 + $0x8] sm:$0xff]
  %v1190 = vld [vmem:[%s17 + $0x10] sm:$0xff]
  %v1191 = vld [vmem:[%s17 + $0x18] sm:$0xff]
  %v1192 = vld [vmem:[%s18] sm:$0x1]
  %v1194 = vperm.slane %v1192, 0
  %v1197 = vsel %vm72, %v1186, 0
  %1199 = vmatpush.msra.mxu0 0.0
  %1200 = vmatpush.msra.mxu0 0.0
  %1201 = vmatpush.msra.mxu0 0.0
  %1202 = vmatpush.msra.mxu0 0.0
  %1203 = vmatpush.msra.mxu0 0.0
  %1204 = vmatpush.msra.mxu0 0.0
  %1205 = vmatpush.msra.mxu0 0.0
  %1206 = vmatpush.msra.mxu0 0.0
  %1207 = vmatpush.msra.mxu0 0.0
  %1208 = vmatpush.msra.mxu0 0.0
  %1209 = vmatpush.msra.mxu0 0.0
  %1210 = vmatpush.msra.mxu0 0.0
  %1211 = vmatpush.msra.mxu0 %v1191
  %1212 = vmatpush.msra.mxu0 %v1190
  %1213 = vmatpush.msra.mxu0 %v1189
  %1214 = vmatpush.msra.mxu0 %v1188
  %1215 = vmatmul.f32.gmra.mxu0 %v1197
  %v1216 = vpop.f32.mrf.mxu0
  %v1217 = vadd.f32 %v1194, %v1216
  %1218 = vdwg.mxu0
  %v1219 = vtanh.pop %v1217
  %v1220 = vld [vmem:[%s19] sm:$0xff]
  %v1221 = vld [vmem:[%s19 + $0x8] sm:$0xff]
  %v1222 = vld [vmem:[%s19 + $0x10] sm:$0xff]
  %v1223 = vld [vmem:[%s19 + $0x18] sm:$0xff]
  %v1224 = vld [vmem:[%s20] sm:$0x1]
  %v1226 = vperm.slane %v1224, 0
  %v1229 = vsel %vm72, %v1219, 0
  %1231 = vmatpush.msra.mxu0 0.0
  %1232 = vmatpush.msra.mxu0 0.0
  %1233 = vmatpush.msra.mxu0 0.0
  %1234 = vmatpush.msra.mxu0 0.0
  %1235 = vmatpush.msra.mxu0 0.0
  %1236 = vmatpush.msra.mxu0 0.0
  %1237 = vmatpush.msra.mxu0 0.0
  %1238 = vmatpush.msra.mxu0 0.0
  %1239 = vmatpush.msra.mxu0 0.0
  %1240 = vmatpush.msra.mxu0 0.0
  %1241 = vmatpush.msra.mxu0 0.0
  %1242 = vmatpush.msra.mxu0 0.0
  %1243 = vmatpush.msra.mxu0 %v1223
  %1244 = vmatpush.msra.mxu0 %v1222
  %1245 = vmatpush.msra.mxu0 %v1221
  %1246 = vmatpush.msra.mxu0 %v1220
  %1247 = vmatmul.f32.gmra.mxu0 %v1229
  %v1248 = vpop.f32.mrf.mxu0
  %v1249 = vadd.f32 %v1226, %v1248
  %1250 = vdwg.mxu0
  %1251 = vst [vmem:[%s21] sm:$0x3] %v1249
  // Predicated region
  $region86: #{multitask_bert_forward.1} parent=0 // pred_check
    _
  $region87: #{multitask_bert_forward.1} parent=0 // pred_check_branch
    %1253 = sbr.rel (0) target = $region89
  $region88: #{multitask_bert_forward.1} parent=0 // pred_region
    _
  $region89: #{multitask_bert_forward.1} parent=0 // pred_fallthru
    _
  // Predicated region
  $region90: #{multitask_bert_forward.1} parent=0 // pred_check
    _
  $region91: #{multitask_bert_forward.1} parent=0 // pred_check_branch
    %1255 = sbr.rel (0) target = $region93
  $region92: #{multitask_bert_forward.1} parent=0 // pred_region
    _
  $region93: #{multitask_bert_forward.1} parent=0 // pred_fallthru
    _

</llo_original>
